<compile_context>
chip_gen: v7x
topology: tpu7x:2x2x1
jax: 0.10.0
libtpu: 0.0.40
codegen_flags: <defaults>
</compile_context>

<pallas_src>
import functools

import jax
import jax.numpy as jnp
import numpy as np
from jax import lax
from jax.experimental import pallas as pl
from jax.experimental.pallas import tpu as pltpu


# ----------------------------- fused Pallas kernel -------------------------- #

def fused_block_kernel(x_ref, w1_ref, b1_ref, g_ref, bb_ref, w2_ref, b2_ref,
                       o_ref, yp_ref, *,
                       kh, kw, pad, c_out, ho1, wo1, wp1, ho2, wp2, lyp):
    cp1 = wp1                     # stride-1 "wide" column pitch of conv1
    mw1 = ho1 * cp1               # conv1 wide columns (garbage cols included)
    mw2 = ho2 * wp2               # conv2 wide columns (garbage cols included)

    # ---- conv1: kh*kw per-tap MXU matmuls on contiguous lane slices of x ----
    # No patch scratch: tap (i,j) operand is one contiguous slice of the padded,
    # spatially-flattened image.  bf16 operands, f32 accumulation.
    y = jnp.zeros((c_out, mw1), jnp.float32)
    for i in range(kh):
        for j in range(kw):
            s0 = i * wp1 + j
            y = y + jnp.dot(w1_ref[i * kw + j], x_ref[0, :, s0:s0 + mw1],
                            preferred_element_type=jnp.float32)
    y = jnp.maximum(y + b1_ref[...], 0.0)

    # ---- per-pixel LayerNorm over channels (= over the C sublane rows), f32 --
    # Garbage (wide-trick) columns are finite, normalized independently and never
    # reach the valid output, so they cannot contaminate results.
    mean = jnp.mean(y, axis=0, keepdims=True)
    diff = y - mean
    var = jnp.mean(diff * diff, axis=0, keepdims=True)
    y = diff * lax.rsqrt(var + 1e-5) * g_ref[...] + bb_ref[...]

    # ---- conv2 padded input: one content store + tiny border stores ----------
    if cp1 == wp2:
        # "same"-style padding (kw-1 == 2*pad): conv1's wide pitch already equals
        # conv2's padded row pitch.  Zero the garbage lanes (they land exactly in
        # conv2's zero-pad columns) and store the whole slab once, shifted by
        # pad*wp2 + pad lanes; only the tiny borders need explicit zeros.
        top = pad * wp2 + pad
        lane = lax.broadcasted_iota(jnp.int32, y.shape, 1)
        y = jnp.where(lane % cp1 < wo1, y, 0.0)
        if top > 0:
            yp_ref[:, 0:top] = jnp.zeros((c_out, top), jnp.float32)
        if lyp > top + mw1:
            yp_ref[:, top + mw1:lyp] = jnp.zeros((c_out, lyp - top - mw1),
                                                 jnp.float32)
        yp_ref[:, top:top + mw1] = y
    else:
        # Generic stride-1 re-pitch (cold path, not traced for the demo config).
        yp_ref[...] = jnp.zeros_like(yp_ref)
        for r in range(ho1):
            d0 = (pad + r) * wp2 + pad
            yp_ref[:, d0:d0 + wo1] = y[:, r * cp1:r * cp1 + wo1]

    # ---- conv2: per-tap matmuls on contiguous lane slices of the f32 scratch --
    z = jnp.zeros((c_out, mw2), jnp.float32)
    for i in range(kh):
        for j in range(kw):
            s0 = i * wp2 + j
            z = z + jnp.dot(w2_ref[i * kw + j],
                            yp_ref[:, s0:s0 + mw2].astype(jnp.bfloat16),
                            preferred_element_type=jnp.float32)
    z = jnp.maximum(z + b2_ref[...], 0.0)

    # ---- ONE lane-dense store of the wide (C, Ho2*Wp2) slab -------------------
    # pitch-Wp2 -> pitch-Wo2 compaction happens in the wrapper (layout plumbing).
    o_ref[0, :, :] = z


# --------------------------------- wrapper ---------------------------------- #

@functools.partial(jax.jit, static_argnames=("kernel_size", "stride", "padding"))
def basic_conv_block(x_nchw, params, *, kernel_size, stride=1, padding=0):
    """Forward pass matching PyTorch BasicConvBlock.  Input/output NCHW f32."""
    if stride != 1:
        # TODO(synk): stride>1 needs a wrapper-side pre-strided layout (or halo
        # DMA gather) so the kernel keeps contiguous lane slices; not implemented.
        raise NotImplementedError("fused Pallas BasicConvBlock supports stride=1")

    B, C_in, H, W = x_nchw.shape
    kh = kw = kernel_size
    p = padding
    C = params["w1"].shape[0]                        # weights are OIHW

    Hp1, Wp1 = H + 2 * p, W + 2 * p
    Ho1, Wo1 = Hp1 - kh + 1, Wp1 - kw + 1
    Hp2, Wp2 = Ho1 + 2 * p, Wo1 + 2 * p
    Ho2, Wo2 = Hp2 - kh + 1, Wp2 - kw + 1
    Mw1, Mw2 = Ho1 * Wp1, Ho2 * Wp2
    Lyp = (kh - 1) * Wp2 + (kw - 1) + Mw2            # conv2 scratch length

    # Pad input channels to the 8-sublane granule so every per-tap matmul has a
    # clean K dimension; the extra zero channels contribute nothing.
    Cin_p = max(8, -(-C_in // 8) * 8)
    w1 = params["w1"]
    if Cin_p != C_in:
        x_nchw = jnp.pad(x_nchw, ((0, 0), (0, Cin_p - C_in), (0, 0), (0, 0)))
        w1 = jnp.pad(w1, ((0, 0), (0, Cin_p - C_in), (0, 0), (0, 0)))

    # Spatial zero pad (+1 extra bottom row keeps the stride-1 "wide" tap slices
    # of the flattened image in bounds), flatten, bf16 MXU operand.
    xp = jnp.pad(x_nchw, ((0, 0), (0, 0), (p, p + 1), (p, p)))
    Lx = (Hp1 + 1) * Wp1
    xflat = xp.reshape(B, Cin_p, Lx).astype(jnp.bfloat16)

    # Per-tap weights: tap t = i*kw + j is one (C_out, C_in) matrix.
    w1t = w1.transpose(2, 3, 0, 1).reshape(kh * kw, C, Cin_p).astype(jnp.bfloat16)
    w2t = params["w2"].transpose(2, 3, 0, 1).reshape(kh * kw, C, C).astype(jnp.bfloat16)
    b1 = params["b1"].reshape(C, 1).astype(jnp.float32)
    b2 = params["b2"].reshape(C, 1).astype(jnp.float32)
    gamma = params["gamma"].reshape(C, 1).astype(jnp.float32)
    beta = params["beta"].reshape(C, 1).astype(jnp.float32)

    kern = functools.partial(
        fused_block_kernel, kh=kh, kw=kw, pad=p, c_out=C,
        ho1=Ho1, wo1=Wo1, wp1=Wp1, ho2=Ho2, wp2=Wp2, lyp=Lyp)

    out_wide = pl.pallas_call(
        kern,
        out_shape=jax.ShapeDtypeStruct((B, C, Mw2), jnp.float32),
        grid=(B,),
        in_specs=[
            pl.BlockSpec((1, Cin_p, Lx), lambda b: (b, 0, 0)),       # one image/step
            pl.BlockSpec((kh * kw, C, Cin_p), lambda b: (0, 0, 0)),  # VMEM resident
            pl.BlockSpec((C, 1), lambda b: (0, 0)),
            pl.BlockSpec((C, 1), lambda b: (0, 0)),
            pl.BlockSpec((C, 1), lambda b: (0, 0)),
            pl.BlockSpec((kh * kw, C, C), lambda b: (0, 0, 0)),
            pl.BlockSpec((C, 1), lambda b: (0, 0)),
        ],
        out_specs=pl.BlockSpec((1, C, Mw2), lambda b: (b, 0, 0)),
        scratch_shapes=[pltpu.VMEM((C, Lyp), jnp.float32)],          # conv2 padded LN
        compiler_params=pltpu.CompilerParams(
            dimension_semantics=("parallel",)),
        cost_estimate=pl.CostEstimate(
            flops=2 * B * C * kh * kw * (Cin_p * Mw1 + C * Mw2),
            transcendentals=B * Mw1,
            bytes_accessed=xflat.size * 2 + (w1t.size + w2t.size) * 2
                           + (b1.size + b2.size + gamma.size + beta.size) * 4
                           + B * C * Mw2 * 4),
    )(xflat, w1t, b1, gamma, beta, w2t, b2)

    # Wide (row pitch Wp2) -> dense (Wo2) compaction + NCHW reshape in XLA.
    return out_wide.reshape(B, C, Ho2, Wp2)[:, :, :, :Wo2]


# --------------------------- pure-JAX reference ------------------------------ #

def reference(x_nchw, params, *, kernel_size, stride, padding):
    """Mirrors the PyTorch module.  Conv operands are cast to bf16 (f32
    accumulation) to match the kernel's MXU-native precision choice; all
    epilogue math (bias/ReLU/LayerNorm) is f32."""
    dn = ("NCHW", "OIHW", "NCHW")
    w1 = params["w1"].astype(jnp.bfloat16)
    w2 = params["w2"].astype(jnp.bfloat16)

    y = lax.conv_general_dilated(x_nchw.astype(jnp.bfloat16), w1,
                                 (stride, stride), [(padding, padding)] * 2,
                                 dimension_numbers=dn,
                                 preferred_element_type=jnp.float32)
    y = jnp.maximum(y + params["b1"].reshape(1, -1, 1, 1), 0.0)

    mean = jnp.mean(y, axis=1, keepdims=True)
    var = jnp.mean((y - mean) ** 2, axis=1, keepdims=True)
    y = (y - mean) * lax.rsqrt(var + 1e-5)
    y = y * params["gamma"].reshape(1, -1, 1, 1) + params["beta"].reshape(1, -1, 1, 1)

    z = lax.conv_general_dilated(y.astype(jnp.bfloat16), w2, (1, 1),
                                 [(padding, padding)] * 2,
                                 dimension_numbers=dn,
                                 preferred_element_type=jnp.float32)
    return jnp.maximum(z + params["b2"].reshape(1, -1, 1, 1), 0.0)


# ----------------------------------- main ------------------------------------ #

if __name__ == "__main__":
    B, C_in, H, W = 2, 4, 16, 16
    C_out, ksize, stride, padding = 8, 3, 1, 1

    key = jax.random.PRNGKey(0)
    k1, k2, k3, k4, k5, k6, k7 = jax.random.split(key, 7)

    # Synthetic parameters in PyTorch layouts: conv weights OIHW, LN weight/bias (C,).
    params = dict(
        w1=jax.random.normal(k1, (C_out, C_in, ksize, ksize), jnp.float32) * 0.2,
        b1=jax.random.normal(k2, (C_out,), jnp.float32) * 0.1,
        gamma=1.0 + 0.1 * jax.random.normal(k3, (C_out,), jnp.float32),
        beta=0.1 * jax.random.normal(k4, (C_out,), jnp.float32),
        w2=jax.random.normal(k5, (C_out, C_out, ksize, ksize), jnp.float32) * 0.2,
        b2=jax.random.normal(k6, (C_out,), jnp.float32) * 0.1,
    )
    x = jax.random.normal(k7, (B, C_in, H, W), jnp.float32)

    out = basic_conv_block(x, params, kernel_size=ksize, stride=stride,
                           padding=padding)
    out = jax.block_until_ready(out)
    assert out.shape == (B, C_out, H, W), out.shape

    ref = reference(x, params, kernel_size=ksize, stride=stride, padding=padding)
    # Tolerance reflects the intentional bf16 MXU operands; the reference uses the
    # same operand precision, so this stays a real check rather than a mask.
    np.testing.assert_allclose(np.asarray(out), np.asarray(ref),
                               rtol=1e-2, atol=1e-2)

    print("KERNEL_OK")
</pallas_src>

<mosaic_0001>
module attributes {stable_mosaic.version = 11 : i64} {
  func.func @fused_block_kernel(%arg0: i32, %arg1: memref<1x8x342xbf16, #tpu.memory_space<vmem>>, %arg2: memref<9x8x8xbf16, #tpu.memory_space<vmem>>, %arg3: memref<8x1xf32, #tpu.memory_space<vmem>>, %arg4: memref<8x1xf32, #tpu.memory_space<vmem>>, %arg5: memref<8x1xf32, #tpu.memory_space<vmem>>, %arg6: memref<9x8x8xbf16, #tpu.memory_space<vmem>>, %arg7: memref<8x1xf32, #tpu.memory_space<vmem>>, %arg8: memref<1x8x288xf32, #tpu.memory_space<vmem>>, %arg9: memref<8x326xf32, #tpu.memory_space<vmem>>) attributes {dimension_semantics = [#tpu.dimension_semantics<parallel>], iteration_bounds = array<i64: 2>, scalar_prefetch = 0 : i64, scratch_operands = 1 : i64, tpu.core_type = #tpu.core_type<tc>, window_params = [{transform_indices = @transform_0, window_bounds = array<i64: 1, 8, 342>}, {pipeline_mode = #tpu.pipeline_mode<synchronous>, transform_indices = @transform_1, window_bounds = array<i64: 9, 8, 8>}, {pipeline_mode = #tpu.pipeline_mode<synchronous>, transform_indices = @transform_2, window_bounds = array<i64: 8, 1>}, {pipeline_mode = #tpu.pipeline_mode<synchronous>, transform_indices = @transform_3, window_bounds = array<i64: 8, 1>}, {pipeline_mode = #tpu.pipeline_mode<synchronous>, transform_indices = @transform_4, window_bounds = array<i64: 8, 1>}, {pipeline_mode = #tpu.pipeline_mode<synchronous>, transform_indices = @transform_5, window_bounds = array<i64: 9, 8, 8>}, {pipeline_mode = #tpu.pipeline_mode<synchronous>, transform_indices = @transform_6, window_bounds = array<i64: 8, 1>}, {transform_indices = @transform_7, window_bounds = array<i64: 1, 8, 288>}]} {
    %cst = arith.constant 0.000000e+00 : f32
    %0 = vector.broadcast %cst : f32 to vector<8x288xf32>
    %c0 = arith.constant 0 : index
    %c0_0 = arith.constant 0 : index
    %c0_1 = arith.constant 0 : index
    %1 = vector.load %arg2[%c0, %c0_0, %c0_1] : memref<9x8x8xbf16, #tpu.memory_space<vmem>>, vector<1x8x8xbf16>
    %2 = vector.shape_cast %1 : vector<1x8x8xbf16> to vector<8x8xbf16>
    %c0_2 = arith.constant 0 : index
    %c0_3 = arith.constant 0 : index
    %c0_4 = arith.constant 0 : index
    %3 = vector.load %arg1[%c0_2, %c0_3, %c0_4] : memref<1x8x342xbf16, #tpu.memory_space<vmem>>, vector<1x8x288xbf16>
    %4 = vector.shape_cast %3 : vector<1x8x288xbf16> to vector<8x288xbf16>
    %cst_5 = arith.constant dense<0.000000e+00> : vector<8x288xf32>
    %5 = tpu.matmul %2, %4, %cst_5 {dimension_numbers = #tpu.dot_dimension_numbers<[1], [0], [0], [1], [0, 0, 1, 1], [], []>} : vector<8x8xbf16>, vector<8x288xbf16>, vector<8x288xf32> -> vector<8x288xf32>
    %6 = arith.addf %0, %5 : vector<8x288xf32>
    %c1 = arith.constant 1 : index
    %c0_6 = arith.constant 0 : index
    %c0_7 = arith.constant 0 : index
    %7 = vector.load %arg2[%c1, %c0_6, %c0_7] : memref<9x8x8xbf16, #tpu.memory_space<vmem>>, vector<1x8x8xbf16>
    %8 = vector.shape_cast %7 : vector<1x8x8xbf16> to vector<8x8xbf16>
    %c0_8 = arith.constant 0 : index
    %c0_9 = arith.constant 0 : index
    %c1_10 = arith.constant 1 : index
    %9 = vector.load %arg1[%c0_8, %c0_9, %c1_10] : memref<1x8x342xbf16, #tpu.memory_space<vmem>>, vector<1x8x288xbf16>
    %10 = vector.shape_cast %9 : vector<1x8x288xbf16> to vector<8x288xbf16>
    %cst_11 = arith.constant dense<0.000000e+00> : vector<8x288xf32>
    %11 = tpu.matmul %8, %10, %cst_11 {dimension_numbers = #tpu.dot_dimension_numbers<[1], [0], [0], [1], [0, 0, 1, 1], [], []>} : vector<8x8xbf16>, vector<8x288xbf16>, vector<8x288xf32> -> vector<8x288xf32>
    %12 = arith.addf %6, %11 : vector<8x288xf32>
    %c2 = arith.constant 2 : index
    %c0_12 = arith.constant 0 : index
    %c0_13 = arith.constant 0 : index
    %13 = vector.load %arg2[%c2, %c0_12, %c0_13] : memref<9x8x8xbf16, #tpu.memory_space<vmem>>, vector<1x8x8xbf16>
    %14 = vector.shape_cast %13 : vector<1x8x8xbf16> to vector<8x8xbf16>
    %c0_14 = arith.constant 0 : index
    %c0_15 = arith.constant 0 : index
    %c2_16 = arith.constant 2 : index
    %15 = vector.load %arg1[%c0_14, %c0_15, %c2_16] : memref<1x8x342xbf16, #tpu.memory_space<vmem>>, vector<1x8x288xbf16>
    %16 = vector.shape_cast %15 : vector<1x8x288xbf16> to vector<8x288xbf16>
    %cst_17 = arith.constant dense<0.000000e+00> : vector<8x288xf32>
    %17 = tpu.matmul %14, %16, %cst_17 {dimension_numbers = #tpu.dot_dimension_numbers<[1], [0], [0], [1], [0, 0, 1, 1], [], []>} : vector<8x8xbf16>, vector<8x288xbf16>, vector<8x288xf32> -> vector<8x288xf32>
    %18 = arith.addf %12, %17 : vector<8x288xf32>
    %c3 = arith.constant 3 : index
    %c0_18 = arith.constant 0 : index
    %c0_19 = arith.constant 0 : index
    %19 = vector.load %arg2[%c3, %c0_18, %c0_19] : memref<9x8x8xbf16, #tpu.memory_space<vmem>>, vector<1x8x8xbf16>
    %20 = vector.shape_cast %19 : vector<1x8x8xbf16> to vector<8x8xbf16>
    %c0_20 = arith.constant 0 : index
    %c0_21 = arith.constant 0 : index
    %c18 = arith.constant 18 : index
    %21 = vector.load %arg1[%c0_20, %c0_21, %c18] : memref<1x8x342xbf16, #tpu.memory_space<vmem>>, vector<1x8x288xbf16>
    %22 = vector.shape_cast %21 : vector<1x8x288xbf16> to vector<8x288xbf16>
    %cst_22 = arith.constant dense<0.000000e+00> : vector<8x288xf32>
    %23 = tpu.matmul %20, %22, %cst_22 {dimension_numbers = #tpu.dot_dimension_numbers<[1], [0], [0], [1], [0, 0, 1, 1], [], []>} : vector<8x8xbf16>, vector<8x288xbf16>, vector<8x288xf32> -> vector<8x288xf32>
    %24 = arith.addf %18, %23 : vector<8x288xf32>
    %c4 = arith.constant 4 : index
    %c0_23 = arith.constant 0 : index
    %c0_24 = arith.constant 0 : index
    %25 = vector.load %arg2[%c4, %c0_23, %c0_24] : memref<9x8x8xbf16, #tpu.memory_space<vmem>>, vector<1x8x8xbf16>
    %26 = vector.shape_cast %25 : vector<1x8x8xbf16> to vector<8x8xbf16>
    %c0_25 = arith.constant 0 : index
    %c0_26 = arith.constant 0 : index
    %c19 = arith.constant 19 : index
    %27 = vector.load %arg1[%c0_25, %c0_26, %c19] : memref<1x8x342xbf16, #tpu.memory_space<vmem>>, vector<1x8x288xbf16>
    %28 = vector.shape_cast %27 : vector<1x8x288xbf16> to vector<8x288xbf16>
    %cst_27 = arith.constant dense<0.000000e+00> : vector<8x288xf32>
    %29 = tpu.matmul %26, %28, %cst_27 {dimension_numbers = #tpu.dot_dimension_numbers<[1], [0], [0], [1], [0, 0, 1, 1], [], []>} : vector<8x8xbf16>, vector<8x288xbf16>, vector<8x288xf32> -> vector<8x288xf32>
    %30 = arith.addf %24, %29 : vector<8x288xf32>
    %c5 = arith.constant 5 : index
    %c0_28 = arith.constant 0 : index
    %c0_29 = arith.constant 0 : index
    %31 = vector.load %arg2[%c5, %c0_28, %c0_29] : memref<9x8x8xbf16, #tpu.memory_space<vmem>>, vector<1x8x8xbf16>
    %32 = vector.shape_cast %31 : vector<1x8x8xbf16> to vector<8x8xbf16>
    %c0_30 = arith.constant 0 : index
    %c0_31 = arith.constant 0 : index
    %c20 = arith.constant 20 : index
    %33 = vector.load %arg1[%c0_30, %c0_31, %c20] : memref<1x8x342xbf16, #tpu.memory_space<vmem>>, vector<1x8x288xbf16>
    %34 = vector.shape_cast %33 : vector<1x8x288xbf16> to vector<8x288xbf16>
    %cst_32 = arith.constant dense<0.000000e+00> : vector<8x288xf32>
    %35 = tpu.matmul %32, %34, %cst_32 {dimension_numbers = #tpu.dot_dimension_numbers<[1], [0], [0], [1], [0, 0, 1, 1], [], []>} : vector<8x8xbf16>, vector<8x288xbf16>, vector<8x288xf32> -> vector<8x288xf32>
    %36 = arith.addf %30, %35 : vector<8x288xf32>
    %c6 = arith.constant 6 : index
    %c0_33 = arith.constant 0 : index
    %c0_34 = arith.constant 0 : index
    %37 = vector.load %arg2[%c6, %c0_33, %c0_34] : memref<9x8x8xbf16, #tpu.memory_space<vmem>>, vector<1x8x8xbf16>
    %38 = vector.shape_cast %37 : vector<1x8x8xbf16> to vector<8x8xbf16>
    %c0_35 = arith.constant 0 : index
    %c0_36 = arith.constant 0 : index
    %c36 = arith.constant 36 : index
    %39 = vector.load %arg1[%c0_35, %c0_36, %c36] : memref<1x8x342xbf16, #tpu.memory_space<vmem>>, vector<1x8x288xbf16>
    %40 = vector.shape_cast %39 : vector<1x8x288xbf16> to vector<8x288xbf16>
    %cst_37 = arith.constant dense<0.000000e+00> : vector<8x288xf32>
    %41 = tpu.matmul %38, %40, %cst_37 {dimension_numbers = #tpu.dot_dimension_numbers<[1], [0], [0], [1], [0, 0, 1, 1], [], []>} : vector<8x8xbf16>, vector<8x288xbf16>, vector<8x288xf32> -> vector<8x288xf32>
    %42 = arith.addf %36, %41 : vector<8x288xf32>
    %c7 = arith.constant 7 : index
    %c0_38 = arith.constant 0 : index
    %c0_39 = arith.constant 0 : index
    %43 = vector.load %arg2[%c7, %c0_38, %c0_39] : memref<9x8x8xbf16, #tpu.memory_space<vmem>>, vector<1x8x8xbf16>
    %44 = vector.shape_cast %43 : vector<1x8x8xbf16> to vector<8x8xbf16>
    %c0_40 = arith.constant 0 : index
    %c0_41 = arith.constant 0 : index
    %c37 = arith.constant 37 : index
    %45 = vector.load %arg1[%c0_40, %c0_41, %c37] : memref<1x8x342xbf16, #tpu.memory_space<vmem>>, vector<1x8x288xbf16>
    %46 = vector.shape_cast %45 : vector<1x8x288xbf16> to vector<8x288xbf16>
    %cst_42 = arith.constant dense<0.000000e+00> : vector<8x288xf32>
    %47 = tpu.matmul %44, %46, %cst_42 {dimension_numbers = #tpu.dot_dimension_numbers<[1], [0], [0], [1], [0, 0, 1, 1], [], []>} : vector<8x8xbf16>, vector<8x288xbf16>, vector<8x288xf32> -> vector<8x288xf32>
    %48 = arith.addf %42, %47 : vector<8x288xf32>
    %c8 = arith.constant 8 : index
    %c0_43 = arith.constant 0 : index
    %c0_44 = arith.constant 0 : index
    %49 = vector.load %arg2[%c8, %c0_43, %c0_44] : memref<9x8x8xbf16, #tpu.memory_space<vmem>>, vector<1x8x8xbf16>
    %50 = vector.shape_cast %49 : vector<1x8x8xbf16> to vector<8x8xbf16>
    %c0_45 = arith.constant 0 : index
    %c0_46 = arith.constant 0 : index
    %c38 = arith.constant 38 : index
    %51 = vector.load %arg1[%c0_45, %c0_46, %c38] : memref<1x8x342xbf16, #tpu.memory_space<vmem>>, vector<1x8x288xbf16>
    %52 = vector.shape_cast %51 : vector<1x8x288xbf16> to vector<8x288xbf16>
    %cst_47 = arith.constant dense<0.000000e+00> : vector<8x288xf32>
    %53 = tpu.matmul %50, %52, %cst_47 {dimension_numbers = #tpu.dot_dimension_numbers<[1], [0], [0], [1], [0, 0, 1, 1], [], []>} : vector<8x8xbf16>, vector<8x288xbf16>, vector<8x288xf32> -> vector<8x288xf32>
    %54 = arith.addf %48, %53 : vector<8x288xf32>
    %c0_48 = arith.constant 0 : index
    %c0_49 = arith.constant 0 : index
    %55 = vector.load %arg3[%c0_48, %c0_49] : memref<8x1xf32, #tpu.memory_space<vmem>>, vector<8x1xf32>
    %56 = vector.broadcast %55 : vector<8x1xf32> to vector<8x288xf32>
    %57 = arith.addf %54, %56 : vector<8x288xf32>
    %cst_50 = arith.constant 0.000000e+00 : f32
    %58 = vector.broadcast %cst_50 : f32 to vector<8x288xf32>
    %59 = arith.maximumf %57, %58 : vector<8x288xf32>
    %cst_51 = arith.constant dense<0.000000e+00> : vector<288xf32>
    %60 = vector.multi_reduction <add>, %59, %cst_51 [0] : vector<8x288xf32> to vector<288xf32>
    %61 = vector.shape_cast %60 : vector<288xf32> to vector<1x288xf32>
    %cst_52 = arith.constant 8.000000e+00 : f32
    %62 = vector.broadcast %cst_52 : f32 to vector<1x288xf32>
    %63 = arith.divf %61, %62 : vector<1x288xf32>
    %64 = vector.broadcast %63 : vector<1x288xf32> to vector<8x288xf32>
    %65 = arith.subf %59, %64 : vector<8x288xf32>
    %66 = arith.mulf %65, %65 : vector<8x288xf32>
    %cst_53 = arith.constant dense<0.000000e+00> : vector<288xf32>
    %67 = vector.multi_reduction <add>, %66, %cst_53 [0] : vector<8x288xf32> to vector<288xf32>
    %68 = vector.shape_cast %67 : vector<288xf32> to vector<1x288xf32>
    %cst_54 = arith.constant 8.000000e+00 : f32
    %69 = vector.broadcast %cst_54 : f32 to vector<1x288xf32>
    %70 = arith.divf %68, %69 : vector<1x288xf32>
    %cst_55 = arith.constant 9.99999974E-6 : f32
    %71 = vector.broadcast %cst_55 : f32 to vector<1x288xf32>
    %72 = arith.addf %70, %71 : vector<1x288xf32>
    %73 = math.rsqrt %72 : vector<1x288xf32>
    %74 = vector.broadcast %73 : vector<1x288xf32> to vector<8x288xf32>
    %75 = arith.mulf %65, %74 : vector<8x288xf32>
    %c0_56 = arith.constant 0 : index
    %c0_57 = arith.constant 0 : index
    %76 = vector.load %arg4[%c0_56, %c0_57] : memref<8x1xf32, #tpu.memory_space<vmem>>, vector<8x1xf32>
    %77 = vector.broadcast %76 : vector<8x1xf32> to vector<8x288xf32>
    %78 = arith.mulf %75, %77 : vector<8x288xf32>
    %c0_58 = arith.constant 0 : index
    %c0_59 = arith.constant 0 : index
    %79 = vector.load %arg5[%c0_58, %c0_59] : memref<8x1xf32, #tpu.memory_space<vmem>>, vector<8x1xf32>
    %80 = vector.broadcast %79 : vector<8x1xf32> to vector<8x288xf32>
    %81 = arith.addf %78, %80 : vector<8x288xf32>
    %82 = tpu.iota {dimensions = array<i32: 1>} : vector<8x288xi32>
    %c18_i32 = arith.constant 18 : i32
    %c0_i32 = arith.constant 0 : i32
    %83 = arith.cmpi eq, %c18_i32, %c0_i32 : i32
    %c1_i32 = arith.constant 1 : i32
    %84 = arith.select %83, %c1_i32, %c18_i32 : i32
    %85 = vector.broadcast %84 : i32 to vector<8x288xi32>
    %86 = arith.remsi %82, %85 : vector<8x288xi32>
    %c0_i32_60 = arith.constant 0 : i32
    %87 = vector.broadcast %c0_i32_60 : i32 to vector<8x288xi32>
    %88 = arith.cmpi ne, %86, %87 : vector<8x288xi32>
    %c0_i32_61 = arith.constant 0 : i32
    %89 = vector.broadcast %c0_i32_61 : i32 to vector<8x288xi32>
    %90 = arith.cmpi slt, %86, %89 : vector<8x288xi32>
    %c0_i32_62 = arith.constant 0 : i32
    %91 = arith.cmpi slt, %84, %c0_i32_62 : i32
    %92 = vector.broadcast %91 : i1 to vector<8x288xi1>
    %93 = vector.broadcast %92 : vector<8x288xi1> to vector<8x288xi1>
    %94 = arith.xori %90, %93 : vector<8x288xi1>
    %95 = arith.andi %94, %88 : vector<8x288xi1>
    %96 = vector.broadcast %84 : i32 to vector<8x288xi32>
    %97 = arith.addi %86, %96 : vector<8x288xi32>
    %98 = arith.select %95, %97, %86 : vector<8x288xi1>, vector<8x288xi32>
    %c16_i32 = arith.constant 16 : i32
    %99 = vector.broadcast %c16_i32 : i32 to vector<8x288xi32>
    %100 = arith.cmpi slt, %98, %99 : vector<8x288xi32>
    %cst_63 = arith.constant 0.000000e+00 : f32
    %101 = vector.broadcast %cst_63 : f32 to vector<8x288xf32>
    %102 = arith.select %100, %81, %101 : vector<8x288xi1>, vector<8x288xf32>
    %cst_64 = arith.constant 0.000000e+00 : f32
    %103 = vector.broadcast %cst_64 : f32 to vector<8x19xf32>
    %c0_65 = arith.constant 0 : index
    %c0_66 = arith.constant 0 : index
    %104 = vector.load %arg9[%c0_65, %c0_66] : memref<8x326xf32, #tpu.memory_space<vmem>>, vector<8x19xf32>
    tpu.vector_store %arg9[%c0_65, %c0_66], %103 {strides = array<i32>} : memref<8x326xf32, #tpu.memory_space<vmem>>, vector<8x19xf32>,
    %cst_67 = arith.constant 0.000000e+00 : f32
    %105 = vector.broadcast %cst_67 : f32 to vector<8x19xf32>
    %c0_68 = arith.constant 0 : index
    %c307 = arith.constant 307 : index
    %106 = vector.load %arg9[%c0_68, %c307] : memref<8x326xf32, #tpu.memory_space<vmem>>, vector<8x19xf32>
    tpu.vector_store %arg9[%c0_68, %c307], %105 {strides = array<i32>} : memref<8x326xf32, #tpu.memory_space<vmem>>, vector<8x19xf32>,
    %c0_69 = arith.constant 0 : index
    %c19_70 = arith.constant 19 : index
    %107 = vector.load %arg9[%c0_69, %c19_70] : memref<8x326xf32, #tpu.memory_space<vmem>>, vector<8x288xf32>
    tpu.vector_store %arg9[%c0_69, %c19_70], %102 {strides = array<i32>} : memref<8x326xf32, #tpu.memory_space<vmem>>, vector<8x288xf32>,
    %cst_71 = arith.constant 0.000000e+00 : f32
    %108 = vector.broadcast %cst_71 : f32 to vector<8x288xf32>
    %c0_72 = arith.constant 0 : index
    %c0_73 = arith.constant 0 : index
    %c0_74 = arith.constant 0 : index
    %109 = vector.load %arg6[%c0_72, %c0_73, %c0_74] : memref<9x8x8xbf16, #tpu.memory_space<vmem>>, vector<1x8x8xbf16>
    %110 = vector.shape_cast %109 : vector<1x8x8xbf16> to vector<8x8xbf16>
    %c0_75 = arith.constant 0 : index
    %c0_76 = arith.constant 0 : index
    %111 = vector.load %arg9[%c0_75, %c0_76] : memref<8x326xf32, #tpu.memory_space<vmem>>, vector<8x288xf32>
    %112 = arith.truncf %111 : vector<8x288xf32> to vector<8x288xbf16>
    %cst_77 = arith.constant dense<0.000000e+00> : vector<8x288xf32>
    %113 = tpu.matmul %110, %112, %cst_77 {dimension_numbers = #tpu.dot_dimension_numbers<[1], [0], [0], [1], [0, 0, 1, 1], [], []>} : vector<8x8xbf16>, vector<8x288xbf16>, vector<8x288xf32> -> vector<8x288xf32>
    %114 = arith.addf %108, %113 : vector<8x288xf32>
    %c1_78 = arith.constant 1 : index
    %c0_79 = arith.constant 0 : index
    %c0_80 = arith.constant 0 : index
    %115 = vector.load %arg6[%c1_78, %c0_79, %c0_80] : memref<9x8x8xbf16, #tpu.memory_space<vmem>>, vector<1x8x8xbf16>
    %116 = vector.shape_cast %115 : vector<1x8x8xbf16> to vector<8x8xbf16>
    %c0_81 = arith.constant 0 : index
    %c1_82 = arith.constant 1 : index
    %117 = vector.load %arg9[%c0_81, %c1_82] : memref<8x326xf32, #tpu.memory_space<vmem>>, vector<8x288xf32>
    %118 = arith.truncf %117 : vector<8x288xf32> to vector<8x288xbf16>
    %cst_83 = arith.constant dense<0.000000e+00> : vector<8x288xf32>
    %119 = tpu.matmul %116, %118, %cst_83 {dimension_numbers = #tpu.dot_dimension_numbers<[1], [0], [0], [1], [0, 0, 1, 1], [], []>} : vector<8x8xbf16>, vector<8x288xbf16>, vector<8x288xf32> -> vector<8x288xf32>
    %120 = arith.addf %114, %119 : vector<8x288xf32>
    %c2_84 = arith.constant 2 : index
    %c0_85 = arith.constant 0 : index
    %c0_86 = arith.constant 0 : index
    %121 = vector.load %arg6[%c2_84, %c0_85, %c0_86] : memref<9x8x8xbf16, #tpu.memory_space<vmem>>, vector<1x8x8xbf16>
    %122 = vector.shape_cast %121 : vector<1x8x8xbf16> to vector<8x8xbf16>
    %c0_87 = arith.constant 0 : index
    %c2_88 = arith.constant 2 : index
    %123 = vector.load %arg9[%c0_87, %c2_88] : memref<8x326xf32, #tpu.memory_space<vmem>>, vector<8x288xf32>
    %124 = arith.truncf %123 : vector<8x288xf32> to vector<8x288xbf16>
    %cst_89 = arith.constant dense<0.000000e+00> : vector<8x288xf32>
    %125 = tpu.matmul %122, %124, %cst_89 {dimension_numbers = #tpu.dot_dimension_numbers<[1], [0], [0], [1], [0, 0, 1, 1], [], []>} : vector<8x8xbf16>, vector<8x288xbf16>, vector<8x288xf32> -> vector<8x288xf32>
    %126 = arith.addf %120, %125 : vector<8x288xf32>
    %c3_90 = arith.constant 3 : index
    %c0_91 = arith.constant 0 : index
    %c0_92 = arith.constant 0 : index
    %127 = vector.load %arg6[%c3_90, %c0_91, %c0_92] : memref<9x8x8xbf16, #tpu.memory_space<vmem>>, vector<1x8x8xbf16>
    %128 = vector.shape_cast %127 : vector<1x8x8xbf16> to vector<8x8xbf16>
    %c0_93 = arith.constant 0 : index
    %c18_94 = arith.constant 18 : index
    %129 = vector.load %arg9[%c0_93, %c18_94] : memref<8x326xf32, #tpu.memory_space<vmem>>, vector<8x288xf32>
    %130 = arith.truncf %129 : vector<8x288xf32> to vector<8x288xbf16>
    %cst_95 = arith.constant dense<0.000000e+00> : vector<8x288xf32>
    %131 = tpu.matmul %128, %130, %cst_95 {dimension_numbers = #tpu.dot_dimension_numbers<[1], [0], [0], [1], [0, 0, 1, 1], [], []>} : vector<8x8xbf16>, vector<8x288xbf16>, vector<8x288xf32> -> vector<8x288xf32>
    %132 = arith.addf %126, %131 : vector<8x288xf32>
    %c4_96 = arith.constant 4 : index
    %c0_97 = arith.constant 0 : index
    %c0_98 = arith.constant 0 : index
    %133 = vector.load %arg6[%c4_96, %c0_97, %c0_98] : memref<9x8x8xbf16, #tpu.memory_space<vmem>>, vector<1x8x8xbf16>
    %134 = vector.shape_cast %133 : vector<1x8x8xbf16> to vector<8x8xbf16>
    %c0_99 = arith.constant 0 : index
    %c19_100 = arith.constant 19 : index
    %135 = vector.load %arg9[%c0_99, %c19_100] : memref<8x326xf32, #tpu.memory_space<vmem>>, vector<8x288xf32>
    %136 = arith.truncf %135 : vector<8x288xf32> to vector<8x288xbf16>
    %cst_101 = arith.constant dense<0.000000e+00> : vector<8x288xf32>
    %137 = tpu.matmul %134, %136, %cst_101 {dimension_numbers = #tpu.dot_dimension_numbers<[1], [0], [0], [1], [0, 0, 1, 1], [], []>} : vector<8x8xbf16>, vector<8x288xbf16>, vector<8x288xf32> -> vector<8x288xf32>
    %138 = arith.addf %132, %137 : vector<8x288xf32>
    %c5_102 = arith.constant 5 : index
    %c0_103 = arith.constant 0 : index
    %c0_104 = arith.constant 0 : index
    %139 = vector.load %arg6[%c5_102, %c0_103, %c0_104] : memref<9x8x8xbf16, #tpu.memory_space<vmem>>, vector<1x8x8xbf16>
    %140 = vector.shape_cast %139 : vector<1x8x8xbf16> to vector<8x8xbf16>
    %c0_105 = arith.constant 0 : index
    %c20_106 = arith.constant 20 : index
    %141 = vector.load %arg9[%c0_105, %c20_106] : memref<8x326xf32, #tpu.memory_space<vmem>>, vector<8x288xf32>
    %142 = arith.truncf %141 : vector<8x288xf32> to vector<8x288xbf16>
    %cst_107 = arith.constant dense<0.000000e+00> : vector<8x288xf32>
    %143 = tpu.matmul %140, %142, %cst_107 {dimension_numbers = #tpu.dot_dimension_numbers<[1], [0], [0], [1], [0, 0, 1, 1], [], []>} : vector<8x8xbf16>, vector<8x288xbf16>, vector<8x288xf32> -> vector<8x288xf32>
    %144 = arith.addf %138, %143 : vector<8x288xf32>
    %c6_108 = arith.constant 6 : index
    %c0_109 = arith.constant 0 : index
    %c0_110 = arith.constant 0 : index
    %145 = vector.load %arg6[%c6_108, %c0_109, %c0_110] : memref<9x8x8xbf16, #tpu.memory_space<vmem>>, vector<1x8x8xbf16>
    %146 = vector.shape_cast %145 : vector<1x8x8xbf16> to vector<8x8xbf16>
    %c0_111 = arith.constant 0 : index
    %c36_112 = arith.constant 36 : index
    %147 = vector.load %arg9[%c0_111, %c36_112] : memref<8x326xf32, #tpu.memory_space<vmem>>, vector<8x288xf32>
    %148 = arith.truncf %147 : vector<8x288xf32> to vector<8x288xbf16>
    %cst_113 = arith.constant dense<0.000000e+00> : vector<8x288xf32>
    %149 = tpu.matmul %146, %148, %cst_113 {dimension_numbers = #tpu.dot_dimension_numbers<[1], [0], [0], [1], [0, 0, 1, 1], [], []>} : vector<8x8xbf16>, vector<8x288xbf16>, vector<8x288xf32> -> vector<8x288xf32>
    %150 = arith.addf %144, %149 : vector<8x288xf32>
    %c7_114 = arith.constant 7 : index
    %c0_115 = arith.constant 0 : index
    %c0_116 = arith.constant 0 : index
    %151 = vector.load %arg6[%c7_114, %c0_115, %c0_116] : memref<9x8x8xbf16, #tpu.memory_space<vmem>>, vector<1x8x8xbf16>
    %152 = vector.shape_cast %151 : vector<1x8x8xbf16> to vector<8x8xbf16>
    %c0_117 = arith.constant 0 : index
    %c37_118 = arith.constant 37 : index
    %153 = vector.load %arg9[%c0_117, %c37_118] : memref<8x326xf32, #tpu.memory_space<vmem>>, vector<8x288xf32>
    %154 = arith.truncf %153 : vector<8x288xf32> to vector<8x288xbf16>
    %cst_119 = arith.constant dense<0.000000e+00> : vector<8x288xf32>
    %155 = tpu.matmul %152, %154, %cst_119 {dimension_numbers = #tpu.dot_dimension_numbers<[1], [0], [0], [1], [0, 0, 1, 1], [], []>} : vector<8x8xbf16>, vector<8x288xbf16>, vector<8x288xf32> -> vector<8x288xf32>
    %156 = arith.addf %150, %155 : vector<8x288xf32>
    %c8_120 = arith.constant 8 : index
    %c0_121 = arith.constant 0 : index
    %c0_122 = arith.constant 0 : index
    %157 = vector.load %arg6[%c8_120, %c0_121, %c0_122] : memref<9x8x8xbf16, #tpu.memory_space<vmem>>, vector<1x8x8xbf16>
    %158 = vector.shape_cast %157 : vector<1x8x8xbf16> to vector<8x8xbf16>
    %c0_123 = arith.constant 0 : index
    %c38_124 = arith.constant 38 : index
    %159 = vector.load %arg9[%c0_123, %c38_124] : memref<8x326xf32, #tpu.memory_space<vmem>>, vector<8x288xf32>
    %160 = arith.truncf %159 : vector<8x288xf32> to vector<8x288xbf16>
    %cst_125 = arith.constant dense<0.000000e+00> : vector<8x288xf32>
    %161 = tpu.matmul %158, %160, %cst_125 {dimension_numbers = #tpu.dot_dimension_numbers<[1], [0], [0], [1], [0, 0, 1, 1], [], []>} : vector<8x8xbf16>, vector<8x288xbf16>, vector<8x288xf32> -> vector<8x288xf32>
    %162 = arith.addf %156, %161 : vector<8x288xf32>
    %c0_126 = arith.constant 0 : index
    %c0_127 = arith.constant 0 : index
    %163 = vector.load %arg7[%c0_126, %c0_127] : memref<8x1xf32, #tpu.memory_space<vmem>>, vector<8x1xf32>
    %164 = vector.broadcast %163 : vector<8x1xf32> to vector<8x288xf32>
    %165 = arith.addf %162, %164 : vector<8x288xf32>
    %cst_128 = arith.constant 0.000000e+00 : f32
    %166 = vector.broadcast %cst_128 : f32 to vector<8x288xf32>
    %167 = arith.maximumf %165, %166 : vector<8x288xf32>
    %c0_129 = arith.constant 0 : index
    %c0_130 = arith.constant 0 : index
    %c0_131 = arith.constant 0 : index
    %168 = vector.load %arg8[%c0_129, %c0_130, %c0_131] : memref<1x8x288xf32, #tpu.memory_space<vmem>>, vector<1x8x288xf32>
    %169 = vector.shape_cast %168 : vector<1x8x288xf32> to vector<8x288xf32>
    %170 = vector.shape_cast %167 : vector<8x288xf32> to vector<1x8x288xf32>
    tpu.vector_store %arg8[%c0_129, %c0_130, %c0_131], %170 {strides = array<i32>} : memref<1x8x288xf32, #tpu.memory_space<vmem>>, vector<1x8x288xf32>,
    return
  }
  func.func @transform_0(%arg0: i32) -> (i32, i32, i32) {
    %c0_i32 = arith.constant 0 : i32
    %c0_i32_0 = arith.constant 0 : i32
    %c0_i32_1 = arith.constant 0 : i32
    return %arg0, %c0_i32, %c0_i32_0 : i32, i32, i32
  }
  func.func @transform_1(%arg0: i32) -> (i32, i32, i32) {
    %c0_i32 = arith.constant 0 : i32
    %c0_i32_0 = arith.constant 0 : i32
    %c0_i32_1 = arith.constant 0 : i32
    %c0_i32_2 = arith.constant 0 : i32
    return %c0_i32, %c0_i32_0, %c0_i32_1 : i32, i32, i32
  }
  func.func @transform_2(%arg0: i32) -> (i32, i32) {
    %c0_i32 = arith.constant 0 : i32
    %c0_i32_0 = arith.constant 0 : i32
    %c0_i32_1 = arith.constant 0 : i32
    return %c0_i32, %c0_i32_0 : i32, i32
  }
  func.func @transform_3(%arg0: i32) -> (i32, i32) {
    %c0_i32 = arith.constant 0 : i32
    %c0_i32_0 = arith.constant 0 : i32
    %c0_i32_1 = arith.constant 0 : i32
    return %c0_i32, %c0_i32_0 : i32, i32
  }
  func.func @transform_4(%arg0: i32) -> (i32, i32) {
    %c0_i32 = arith.constant 0 : i32
    %c0_i32_0 = arith.constant 0 : i32
    %c0_i32_1 = arith.constant 0 : i32
    return %c0_i32, %c0_i32_0 : i32, i32
  }
  func.func @transform_5(%arg0: i32) -> (i32, i32, i32) {
    %c0_i32 = arith.constant 0 : i32
    %c0_i32_0 = arith.constant 0 : i32
    %c0_i32_1 = arith.constant 0 : i32
    %c0_i32_2 = arith.constant 0 : i32
    return %c0_i32, %c0_i32_0, %c0_i32_1 : i32, i32, i32
  }
  func.func @transform_6(%arg0: i32) -> (i32, i32) {
    %c0_i32 = arith.constant 0 : i32
    %c0_i32_0 = arith.constant 0 : i32
    %c0_i32_1 = arith.constant 0 : i32
    return %c0_i32, %c0_i32_0 : i32, i32
  }
  func.func @transform_7(%arg0: i32) -> (i32, i32, i32) {
    %c0_i32 = arith.constant 0 : i32
    %c0_i32_0 = arith.constant 0 : i32
    %c0_i32_1 = arith.constant 0 : i32
    return %arg0, %c0_i32, %c0_i32_0 : i32, i32, i32
  }
}

</mosaic_0001>

<llo_original>
// kernel: basic_conv_block.1
$region0: #{basic_conv_block.1}
  #allocation0 [shape = 'u32[]', space=smem, size = 0x4, offset = 0x4, fixed_abs, tag = 'smem constant byte address 0x4 - core index']
  #allocation1 [shape = 'u32[144,128]{1,0:T(1,128)}', space=vmem, size = 0x12000, scoped, tag = 'internal scratch']
  #allocation2 [shape = 'f32[8,326]{1,0:T(8,128)}', space=vmem, size = 0x3000, scoped, tag = 'scratch operand']
  %s0 = inlined_call_operand.vmem [shape: bf16[2,8,342], index: 0, kind: input, shape index: {}]
  %s1 = inlined_call_operand.vmem [shape: bf16[9,8,8], index: 1, kind: input, shape index: {}]
  %s2 = inlined_call_operand.vmem [shape: f32[8,1], index: 2, kind: input, shape index: {}]
  %s3 = inlined_call_operand.vmem [shape: f32[8,1], index: 3, kind: input, shape index: {}]
  %s4 = inlined_call_operand.vmem [shape: f32[8,1], index: 4, kind: input, shape index: {}]
  %s5 = inlined_call_operand.vmem [shape: bf16[9,8,8], index: 5, kind: input, shape index: {}]
  %s6 = inlined_call_operand.vmem [shape: f32[8,1], index: 6, kind: input, shape index: {}]
  %s7 = inlined_call_operand.vmem [shape: f32[2,8,288], index: 7, kind: output, shape index: {}]
  %s8 = sld [smem:[#allocation0]]
  $region61: #{basic_conv_block.1} parent=0
    _
  %s10 = ssub.s32 1, %s8
  %s11 = scalar_select 0, %s10, %s8
  loop: start=0, step=1, limit=4
  $region2: #{basic_conv_block.1} parent=0 // loop_pre_header
    _
  $region3: #{basic_conv_block.1} parent=0 // loop_header
    %s13 = sphi 0, %s17
    %p14 = scmp.ge.s32.totalorder %s13, 4
    %s23 = sphi 0, %s25
    %s26 = sphi 0, %s23
    %s27 = sphi 0, %s26
    %s43 = sphi 0, %s27
    %s47 = sphi 0, %s47
    %s49 = sphi 0, %s47
    %s50 = sphi 0, %s49
    %s64 = sphi 0, %s50
    %s68 = sphi 0, %s68
    %s70 = sphi 0, %s68
    %s71 = sphi 0, %s70
    %s85 = sphi 0, %s71
    %s89 = sphi 0, %s89
    %s91 = sphi 0, %s89
    %s92 = sphi 0, %s91
    %s106 = sphi 0, %s92
    %s110 = sphi 0, %s110
    %s112 = sphi 0, %s110
    %s113 = sphi 0, %s112
    %s127 = sphi 0, %s113
    %s131 = sphi 0, %s131
    %s133 = sphi 0, %s131
    %s134 = sphi 0, %s133
    %s148 = sphi 0, %s134
    %s152 = sphi 0, %s152
    %s154 = sphi 0, %s152
    %s155 = sphi 0, %s154
    %s169 = sphi 0, %s155
    %s175 = sphi 0, %s177
    %s178 = sphi 0, %s175
    %s179 = sphi 0, %s178
    %s195 = sphi 0, %s179
  $region4: #{basic_conv_block.1} parent=0 // loop_header_branch
    %16 = sbr.rel (%p14) target = $region8
  $region5: #{basic_conv_block.1} parent=0 // loop_body
    %s18 = ssub.s32 %s13, 1
    %s19 = ssub.s32 %s13, 2
    %s20 = sadd.s32 %s13, 1
    %s21 = ssub.s32 %s13, %s20
    %p22 = scmp.eq.s32.totalorder %s21, 0
    %s24 = sadd.s32 %s23, 1
    %s25 = scalar_select %p22, %s23, %s24
    %p28 = pneg %p22
    %p29 = scmp.eq.s32.totalorder %s13, 1
    %p30 = por %p28, %p29
    %p31 = scmp.ne.s32.totalorder %s23, %s26
    %p32 = scmp.eq.s32.totalorder %s13, 0
    %p33 = por %p31, %p32
    %p34 = scmp.ne.s32.totalorder %s23, %s26
    %p35 = scmp.eq.s32.totalorder %s18, 1
    %p36 = por %p34, %p35
    %p37 = scmp.ne.s32.totalorder %s26, %s27
    %p38 = scmp.eq.s32.totalorder %s18, 0
    %p39 = por %p37, %p38
    %p40 = scmp.ne.s32.totalorder %s26, %s27
    %p41 = scmp.eq.s32.totalorder %s19, 1
    %p42 = por %p40, %p41
    %p44 = scmp.ne.s32.totalorder %s27, %s43
    %p45 = scmp.eq.s32.totalorder %s19, 0
    %p46 = por %p44, %p45
    %s48 = sadd.s32 %s47, 1
    %p51 = scmp.eq.s32.totalorder %s13, 1
    %p52 = scmp.ne.s32.totalorder %s47, %s49
    %p53 = scmp.eq.s32.totalorder %s13, 0
    %p54 = por %p52, %p53
    %p55 = scmp.ne.s32.totalorder %s47, %s49
    %p56 = scmp.eq.s32.totalorder %s18, 1
    %p57 = por %p55, %p56
    %p58 = scmp.ne.s32.totalorder %s49, %s50
    %p59 = scmp.eq.s32.totalorder %s18, 0
    %p60 = por %p58, %p59
    %p61 = scmp.ne.s32.totalorder %s49, %s50
    %p62 = scmp.eq.s32.totalorder %s19, 1
    %p63 = por %p61, %p62
    %p65 = scmp.ne.s32.totalorder %s50, %s64
    %p66 = scmp.eq.s32.totalorder %s19, 0
    %p67 = por %p65, %p66
    %s69 = sadd.s32 %s68, 1
    %p72 = scmp.eq.s32.totalorder %s13, 1
    %p73 = scmp.ne.s32.totalorder %s68, %s70
    %p74 = scmp.eq.s32.totalorder %s13, 0
    %p75 = por %p73, %p74
    %p76 = scmp.ne.s32.totalorder %s68, %s70
    %p77 = scmp.eq.s32.totalorder %s18, 1
    %p78 = por %p76, %p77
    %p79 = scmp.ne.s32.totalorder %s70, %s71
    %p80 = scmp.eq.s32.totalorder %s18, 0
    %p81 = por %p79, %p80
    %p82 = scmp.ne.s32.totalorder %s70, %s71
    %p83 = scmp.eq.s32.totalorder %s19, 1
    %p84 = por %p82, %p83
    %p86 = scmp.ne.s32.totalorder %s71, %s85
    %p87 = scmp.eq.s32.totalorder %s19, 0
    %p88 = por %p86, %p87
    %s90 = sadd.s32 %s89, 1
    %p93 = scmp.eq.s32.totalorder %s13, 1
    %p94 = scmp.ne.s32.totalorder %s89, %s91
    %p95 = scmp.eq.s32.totalorder %s13, 0
    %p96 = por %p94, %p95
    %p97 = scmp.ne.s32.totalorder %s89, %s91
    %p98 = scmp.eq.s32.totalorder %s18, 1
    %p99 = por %p97, %p98
    %p100 = scmp.ne.s32.totalorder %s91, %s92
    %p101 = scmp.eq.s32.totalorder %s18, 0
    %p102 = por %p100, %p101
    %p103 = scmp.ne.s32.totalorder %s91, %s92
    %p104 = scmp.eq.s32.totalorder %s19, 1
    %p105 = por %p103, %p104
    %p107 = scmp.ne.s32.totalorder %s92, %s106
    %p108 = scmp.eq.s32.totalorder %s19, 0
    %p109 = por %p107, %p108
    %s111 = sadd.s32 %s110, 1
    %p114 = scmp.eq.s32.totalorder %s13, 1
    %p115 = scmp.ne.s32.totalorder %s110, %s112
    %p116 = scmp.eq.s32.totalorder %s13, 0
    %p117 = por %p115, %p116
    %p118 = scmp.ne.s32.totalorder %s110, %s112
    %p119 = scmp.eq.s32.totalorder %s18, 1
    %p120 = por %p118, %p119
    %p121 = scmp.ne.s32.totalorder %s112, %s113
    %p122 = scmp.eq.s32.totalorder %s18, 0
    %p123 = por %p121, %p122
    %p124 = scmp.ne.s32.totalorder %s112, %s113
    %p125 = scmp.eq.s32.totalorder %s19, 1
    %p126 = por %p124, %p125
    %p128 = scmp.ne.s32.totalorder %s113, %s127
    %p129 = scmp.eq.s32.totalorder %s19, 0
    %p130 = por %p128, %p129
    %s132 = sadd.s32 %s131, 1
    %p135 = scmp.eq.s32.totalorder %s13, 1
    %p136 = scmp.ne.s32.totalorder %s131, %s133
    %p137 = scmp.eq.s32.totalorder %s13, 0
    %p138 = por %p136, %p137
    %p139 = scmp.ne.s32.totalorder %s131, %s133
    %p140 = scmp.eq.s32.totalorder %s18, 1
    %p141 = por %p139, %p140
    %p142 = scmp.ne.s32.totalorder %s133, %s134
    %p143 = scmp.eq.s32.totalorder %s18, 0
    %p144 = por %p142, %p143
    %p145 = scmp.ne.s32.totalorder %s133, %s134
    %p146 = scmp.eq.s32.totalorder %s19, 1
    %p147 = por %p145, %p146
    %p149 = scmp.ne.s32.totalorder %s134, %s148
    %p150 = scmp.eq.s32.totalorder %s19, 0
    %p151 = por %p149, %p150
    %s153 = sadd.s32 %s152, 1
    %p156 = scmp.eq.s32.totalorder %s13, 1
    %p157 = scmp.ne.s32.totalorder %s152, %s154
    %p158 = scmp.eq.s32.totalorder %s13, 0
    %p159 = por %p157, %p158
    %p160 = scmp.ne.s32.totalorder %s152, %s154
    %p161 = scmp.eq.s32.totalorder %s18, 1
    %p162 = por %p160, %p161
    %p163 = scmp.ne.s32.totalorder %s154, %s155
    %p164 = scmp.eq.s32.totalorder %s18, 0
    %p165 = por %p163, %p164
    %p166 = scmp.ne.s32.totalorder %s154, %s155
    %p167 = scmp.eq.s32.totalorder %s19, 1
    %p168 = por %p166, %p167
    %p170 = scmp.ne.s32.totalorder %s155, %s169
    %p171 = scmp.eq.s32.totalorder %s19, 0
    %p172 = por %p170, %p171
    %s173 = ssub.s32 %s13, %s20
    %p174 = scmp.eq.s32.totalorder %s173, 0
    %s176 = sadd.s32 %s175, 1
    %s177 = scalar_select %p174, %s175, %s176
    %p180 = pneg %p174
    %p181 = scmp.eq.s32.totalorder %s13, 1
    %p182 = por %p180, %p181
    %p183 = scmp.ne.s32.totalorder %s175, %s178
    %p184 = scmp.eq.s32.totalorder %s13, 0
    %p185 = por %p183, %p184
    %p186 = scmp.ne.s32.totalorder %s175, %s178
    %p187 = scmp.eq.s32.totalorder %s18, 1
    %p188 = por %p186, %p187
    %p189 = scmp.ne.s32.totalorder %s178, %s179
    %p190 = scmp.eq.s32.totalorder %s18, 0
    %p191 = por %p189, %p190
    %p192 = scmp.ne.s32.totalorder %s178, %s179
    %p193 = scmp.eq.s32.totalorder %s19, 1
    %p194 = por %p192, %p193
    %p196 = scmp.ne.s32.totalorder %s179, %s195
    %p197 = scmp.eq.s32.totalorder %s19, 0
    %p198 = por %p196, %p197
    %p199 = scmp.le.s32.totalorder 1, %s13
    %p200 = scmp.lt.s32.totalorder %s13, 3
    %p201 = pnand %p199, %p200
    %p202 = pneg %p201
    // Predicated region
    $region9: #{basic_conv_block.1} parent=5 // pred_check
      _
    $region10: #{basic_conv_block.1} parent=5 // pred_check_branch
      %204 = sbr.rel (%p201) target = $region12
    $region11: #{basic_conv_block.1} parent=5 // pred_region
      %s205 = ssub.s32 %s13, 1
      // Predicated region
      $region13: #{basic_conv_block.1} parent=11 // pred_check
        %p206 = pneg %p60
      $region14: #{basic_conv_block.1} parent=11 // pred_check_branch
        %208 = sbr.rel (%p206) target = $region16
      $region15: #{basic_conv_block.1} parent=11 // pred_region
        _
      $region16: #{basic_conv_block.1} parent=11 // pred_fallthru
        _
      // Predicated region
      $region17: #{basic_conv_block.1} parent=11 // pred_check
        %p209 = pneg %p81
      $region18: #{basic_conv_block.1} parent=11 // pred_check_branch
        %211 = sbr.rel (%p209) target = $region20
      $region19: #{basic_conv_block.1} parent=11 // pred_region
        _
      $region20: #{basic_conv_block.1} parent=11 // pred_fallthru
        _
      // Predicated region
      $region21: #{basic_conv_block.1} parent=11 // pred_check
        %p212 = pneg %p102
      $region22: #{basic_conv_block.1} parent=11 // pred_check_branch
        %214 = sbr.rel (%p212) target = $region24
      $region23: #{basic_conv_block.1} parent=11 // pred_region
        _
      $region24: #{basic_conv_block.1} parent=11 // pred_fallthru
        _
      // Predicated region
      $region25: #{basic_conv_block.1} parent=11 // pred_check
        %p215 = pneg %p123
      $region26: #{basic_conv_block.1} parent=11 // pred_check_branch
        %217 = sbr.rel (%p215) target = $region28
      $region27: #{basic_conv_block.1} parent=11 // pred_region
        _
      $region28: #{basic_conv_block.1} parent=11 // pred_fallthru
        _
      // Predicated region
      $region29: #{basic_conv_block.1} parent=11 // pred_check
        %p218 = pneg %p144
      $region30: #{basic_conv_block.1} parent=11 // pred_check_branch
        %220 = sbr.rel (%p218) target = $region32
      $region31: #{basic_conv_block.1} parent=11 // pred_region
        _
      $region32: #{basic_conv_block.1} parent=11 // pred_fallthru
        _
      // Predicated region
      $region33: #{basic_conv_block.1} parent=11 // pred_check
        %p221 = pneg %p165
      $region34: #{basic_conv_block.1} parent=11 // pred_check_branch
        %223 = sbr.rel (%p221) target = $region36
      $region35: #{basic_conv_block.1} parent=11 // pred_region
        _
      $region36: #{basic_conv_block.1} parent=11 // pred_fallthru
        _
    $region12: #{basic_conv_block.1} parent=5 // pred_fallthru
      _
    %p224 = scmp.lt.s32.totalorder %s13, 2
    // Predicated region
    $region37: #{basic_conv_block.1} parent=5 // pred_check
      %p225 = pneg %p224
    $region38: #{basic_conv_block.1} parent=5 // pred_check_branch
      %227 = sbr.rel (%p225) target = $region40
    $region39: #{basic_conv_block.1} parent=5 // pred_region
      // Predicated region
      $region41: #{basic_conv_block.1} parent=39 // pred_check
        %p228 = pneg %p33
      $region42: #{basic_conv_block.1} parent=39 // pred_check_branch
        %230 = sbr.rel (%p228) target = $region44
      $region43: #{basic_conv_block.1} parent=39 // pred_region
        %p231 = scmp.lt.s32.totalorder %s13, 1
        %s232 = scalar_select %p231, %s13, 1
        %s233 = smul.addr %s232, 3
        %s234 = smul.addr %s233, 4
        %s235 = scalar_lea.vmem %s0, %s234
      $region44: #{basic_conv_block.1} parent=39 // pred_fallthru
        _
    $region40: #{basic_conv_block.1} parent=5 // pred_fallthru
      _
    %p236 = scmp.le.s32.totalorder 1, %s13
    %p237 = scmp.lt.s32.totalorder %s13, 3
    %p238 = pnand %p236, %p237
    %p239 = pneg %p238
    // Predicated region
    $region45: #{basic_conv_block.1} parent=5 // pred_check
      _
    $region46: #{basic_conv_block.1} parent=5 // pred_check_branch
      %241 = sbr.rel (%p238) target = $region48
    $region47: #{basic_conv_block.1} parent=5 // pred_region
      %s242 = ssub.s32 %s13, 1
      %p243 = scmp.lt.s32.totalorder %s18, 1
      %s244 = scalar_select %p243, %s18, 1
      %s245 = smul.addr %s244, 3
      %s246 = smul.addr %s245, 4
      %s247 = scalar_lea.vmem %s0, %s246
      %p248 = pneg %p39
      %p249 = pneg %p36
      %p250 = pneg %p60
      %p251 = pneg %p57
      %p252 = pneg %p81
      %p253 = pneg %p78
      %p254 = pneg %p102
      %p255 = pneg %p99
      %p256 = pneg %p123
      %p257 = pneg %p120
      %p258 = pneg %p144
      %p259 = pneg %p141
      %p260 = pneg %p165
      %p261 = pneg %p162
      %p262 = pneg %p191
      %p263 = pneg %p188
      %p264 = scmp.lt.s32.totalorder %s18, 1
      %s265 = scalar_select %p264, %s18, 1
      %s266 = smul.addr %s265, 3
      %s267 = smul.addr %s266, 8
      %s268 = scalar_lea.vmem %s7, %s267
      %p269 = scmp.lt.s32.totalorder %s18, 1
      %s270 = scalar_select %p269, %s18, 1
      %s271 = smul.addr %s270, 3
      %s272 = smul.addr %s271, 4
      %s273 = scalar_lea.vmem %s0, %s272
      %p274 = scmp.lt.s32.totalorder %s18, 1
      %s275 = scalar_select %p274, %s18, 1
      %s276 = smul.addr %s275, 3
      %s277 = smul.addr %s276, 8
      %s278 = scalar_lea.vmem %s7, %s277
      %v280 = vld [vmem:[%s1] sm:$0xf]
      %v281 = vld [vmem:[%s273] sm:$0xff]
      %v282 = vld [vmem:[%s273 + $0x8] sm:$0xf]
      %s283 = scalar_lea.vmem %s1, 4
      %v284 = vld [vmem:[%s283] sm:$0xf]
      %v287 = vunpack.c.l.b16 %v281
      %v288 = vunpack.c.h.b16 %v281
      %v289 = vunpack.c.l.b16 %v282
      %v290 = vpack.c.b16 %v287, %v287
      %v291 = vpack.c.b16 %v288, %v288
      %v292 = vpack.c.b16 %v289, %v289
      %293 = vrot.lane.b32.xlu0 %v290, 127
      %v294 = vpop.permute.xlu0 %293
      %295 = vrot.lane.b32.xlu0 %v291, 127
      %v296 = vpop.permute.xlu0 %295
      %297 = vrot.lane.b32.xlu0 %v292, 127
      %v298 = vpop.permute.xlu0 %297
      %vm299 = vcmask 1039360
      %v300 = vsel %vm299, %v294, %v296
      %v301 = vsel %vm299, %v296, %v298
      %vm302 = vcmask 64512
      %v304 = vsel %vm302, %v284, 0
      %vm306 = vcmask 1043456
      %v308 = vsel %vm306, %v300, 0
      %v311 = vsel %vm306, %v301, 0
      %v314 = vsel %vm306, %v298, 0
      %316 = vmatprep.subr.bf16.mxu0 %v311
      %317 = vmatpush1.bf16.msra.mxu0 %v308
      %318 = vmatprep.subr.bf16.mxu0 0
      %319 = vmatpush1.bf16.msra.mxu0 0
      %320 = vmatprep.subr.bf16.mxu0 0
      %321 = vmatpush1.bf16.msra.mxu0 0
      %322 = vmatprep.subr.bf16.mxu0 0
      %323 = vmatpush1.bf16.msra.mxu0 0
      %324 = vmatprep.subr.bf16.mxu0 0
      %325 = vmatpush1.bf16.msra.mxu0 0
      %326 = vmatprep.subr.bf16.mxu0 0
      %327 = vmatpush1.bf16.msra.mxu0 0
      %328 = vmatprep.subr.bf16.mxu0 0
      %329 = vmatpush1.bf16.msra.mxu0 0
      %330 = vmatprep.subr.bf16.mxu0 0
      %331 = vmatpush1.bf16.msra.mxu0 0
      %332 = vmatprep.subr.bf16.mxu0 0
      %333 = vmatpush1.bf16.msra.mxu0 0
      %334 = vmatprep.subr.bf16.mxu0 0
      %335 = vmatpush1.bf16.msra.mxu0 0
      %336 = vmatprep.subr.bf16.mxu0 0
      %337 = vmatpush1.bf16.msra.mxu0 0
      %338 = vmatprep.subr.bf16.mxu0 0
      %339 = vmatpush1.bf16.msra.mxu0 0
      %340 = vmatprep.subr.bf16.mxu0 0
      %341 = vmatpush1.bf16.msra.mxu0 0
      %342 = vmatprep.subr.bf16.mxu0 0
      %343 = vmatpush1.bf16.msra.mxu0 0
      %344 = vmatprep.subr.bf16.mxu0 0
      %345 = vmatpush1.bf16.msra.mxu0 0
      %346 = vmatprep.subr.bf16.mxu0 0
      %347 = vmatpush1.bf16.msra.mxu0 0
      %348 = vmatprep.mubr.bf16.mxu0 0
      %349 = vmatmul.mubr.bf16.gmra.mrb[0].mxu0 %v304
      %v350 = vpop.f32.mrb[0].mxu0
      %v351 = vadd.f32 0.0, %v350
      %v352 = vpop.f32.mrb[0].mxu0
      %v353 = vadd.f32 0.0, %v352
      %v354 = vpop.f32.mrb[0].mxu0
      %v355 = vpop.f32.mrb[0].mxu0
      %356 = vdwg.mxu0
      %357 = vmatprep.subr.bf16.mxu0 0
      %358 = vmatpush1.bf16.msra.mxu0 %v314
      %359 = vmatprep.subr.bf16.mxu0 0
      %360 = vmatpush1.bf16.msra.mxu0 0
      %361 = vmatprep.subr.bf16.mxu0 0
      %362 = vmatpush1.bf16.msra.mxu0 0
      %363 = vmatprep.subr.bf16.mxu0 0
      %364 = vmatpush1.bf16.msra.mxu0 0
      %365 = vmatprep.subr.bf16.mxu0 0
      %366 = vmatpush1.bf16.msra.mxu0 0
      %367 = vmatprep.subr.bf16.mxu0 0
      %368 = vmatpush1.bf16.msra.mxu0 0
      %369 = vmatprep.subr.bf16.mxu0 0
      %370 = vmatpush1.bf16.msra.mxu0 0
      %371 = vmatprep.subr.bf16.mxu0 0
      %372 = vmatpush1.bf16.msra.mxu0 0
      %373 = vmatprep.subr.bf16.mxu0 0
      %374 = vmatpush1.bf16.msra.mxu0 0
      %375 = vmatprep.subr.bf16.mxu0 0
      %376 = vmatpush1.bf16.msra.mxu0 0
      %377 = vmatprep.subr.bf16.mxu0 0
      %378 = vmatpush1.bf16.msra.mxu0 0
      %379 = vmatprep.subr.bf16.mxu0 0
      %380 = vmatpush1.bf16.msra.mxu0 0
      %381 = vmatprep.subr.bf16.mxu0 0
      %382 = vmatpush1.bf16.msra.mxu0 0
      %383 = vmatprep.subr.bf16.mxu0 0
      %384 = vmatpush1.bf16.msra.mxu0 0
      %385 = vmatprep.subr.bf16.mxu0 0
      %386 = vmatpush1.bf16.msra.mxu0 0
      %387 = vmatprep.subr.bf16.mxu0 0
      %388 = vmatpush1.bf16.msra.mxu0 0
      %389 = vmatprep.mubr.bf16.mxu0 0
      %390 = vmatmul.mubr.bf16.gmra.mrb[0].mxu0 %v304
      %v391 = vpop.f32.mrb[0].mxu0
      %v392 = vadd.f32 0.0, %v391
      %v393 = vpop.f32.mrb[0].mxu0
      %v394 = vpop.f32.mrb[0].mxu0
      %v395 = vpop.f32.mrb[0].mxu0
      %396 = vdwg.mxu0
      %v398 = vsel %vm302, %v280, 0
      %v401 = vsel %vm306, %v290, 0
      %v404 = vsel %vm306, %v291, 0
      %v407 = vsel %vm306, %v292, 0
      %409 = vmatprep.subr.bf16.mxu0 %v404
      %410 = vmatpush1.bf16.msra.mxu0 %v401
      %411 = vmatprep.subr.bf16.mxu0 0
      %412 = vmatpush1.bf16.msra.mxu0 0
      %413 = vmatprep.subr.bf16.mxu0 0
      %414 = vmatpush1.bf16.msra.mxu0 0
      %415 = vmatprep.subr.bf16.mxu0 0
      %416 = vmatpush1.bf16.msra.mxu0 0
      %417 = vmatprep.subr.bf16.mxu0 0
      %418 = vmatpush1.bf16.msra.mxu0 0
      %419 = vmatprep.subr.bf16.mxu0 0
      %420 = vmatpush1.bf16.msra.mxu0 0
      %421 = vmatprep.subr.bf16.mxu0 0
      %422 = vmatpush1.bf16.msra.mxu0 0
      %423 = vmatprep.subr.bf16.mxu0 0
      %424 = vmatpush1.bf16.msra.mxu0 0
      %425 = vmatprep.subr.bf16.mxu0 0
      %426 = vmatpush1.bf16.msra.mxu0 0
      %427 = vmatprep.subr.bf16.mxu0 0
      %428 = vmatpush1.bf16.msra.mxu0 0
      %429 = vmatprep.subr.bf16.mxu0 0
      %430 = vmatpush1.bf16.msra.mxu0 0
      %431 = vmatprep.subr.bf16.mxu0 0
      %432 = vmatpush1.bf16.msra.mxu0 0
      %433 = vmatprep.subr.bf16.mxu0 0
      %434 = vmatpush1.bf16.msra.mxu0 0
      %435 = vmatprep.subr.bf16.mxu0 0
      %436 = vmatpush1.bf16.msra.mxu0 0
      %437 = vmatprep.subr.bf16.mxu0 0
      %438 = vmatpush1.bf16.msra.mxu0 0
      %439 = vmatprep.subr.bf16.mxu0 0
      %440 = vmatpush1.bf16.msra.mxu0 0
      %441 = vmatprep.mubr.bf16.mxu0 0
      %442 = vmatmul.mubr.bf16.gmra.mrb[0].mxu0 %v398
      %v443 = vpop.f32.mrb[0].mxu0
      %v444 = vadd.f32 %v351, %v443
      %v445 = vpop.f32.mrb[0].mxu0
      %v446 = vadd.f32 %v353, %v445
      %v447 = vpop.f32.mrb[0].mxu0
      %v448 = vpop.f32.mrb[0].mxu0
      %449 = vdwg.mxu0
      %450 = vmatprep.subr.bf16.mxu0 0
      %451 = vmatpush1.bf16.msra.mxu0 %v407
      %452 = vmatprep.subr.bf16.mxu0 0
      %453 = vmatpush1.bf16.msra.mxu0 0
      %454 = vmatprep.subr.bf16.mxu0 0
      %455 = vmatpush1.bf16.msra.mxu0 0
      %456 = vmatprep.subr.bf16.mxu0 0
      %457 = vmatpush1.bf16.msra.mxu0 0
      %458 = vmatprep.subr.bf16.mxu0 0
      %459 = vmatpush1.bf16.msra.mxu0 0
      %460 = vmatprep.subr.bf16.mxu0 0
      %461 = vmatpush1.bf16.msra.mxu0 0
      %462 = vmatprep.subr.bf16.mxu0 0
      %463 = vmatpush1.bf16.msra.mxu0 0
      %464 = vmatprep.subr.bf16.mxu0 0
      %465 = vmatpush1.bf16.msra.mxu0 0
      %466 = vmatprep.subr.bf16.mxu0 0
      %467 = vmatpush1.bf16.msra.mxu0 0
      %468 = vmatprep.subr.bf16.mxu0 0
      %469 = vmatpush1.bf16.msra.mxu0 0
      %470 = vmatprep.subr.bf16.mxu0 0
      %471 = vmatpush1.bf16.msra.mxu0 0
      %472 = vmatprep.subr.bf16.mxu0 0
      %473 = vmatpush1.bf16.msra.mxu0 0
      %474 = vmatprep.subr.bf16.mxu0 0
      %475 = vmatpush1.bf16.msra.mxu0 0
      %476 = vmatprep.subr.bf16.mxu0 0
      %477 = vmatpush1.bf16.msra.mxu0 0
      %478 = vmatprep.subr.bf16.mxu0 0
      %479 = vmatpush1.bf16.msra.mxu0 0
      %480 = vmatprep.subr.bf16.mxu0 0
      %481 = vmatpush1.bf16.msra.mxu0 0
      %482 = vmatprep.mubr.bf16.mxu0 0
      %483 = vmatmul.mubr.bf16.gmra.mrb[0].mxu0 %v398
      %v484 = vpop.f32.mrb[0].mxu0
      %v485 = vadd.f32 %v392, %v484
      %v486 = vpop.f32.mrb[0].mxu0
      %v487 = vpop.f32.mrb[0].mxu0
      %v488 = vpop.f32.mrb[0].mxu0
      %489 = vdwg.mxu0
      %s490 = scalar_lea.vmem %s1, 8
      %v491 = vld [vmem:[%s490] sm:$0xf]
      %492 = vrot.lane.b32.xlu0 %v290, 126
      %v493 = vpop.permute.xlu0 %492
      %494 = vrot.lane.b32.xlu0 %v291, 126
      %v495 = vpop.permute.xlu0 %494
      %496 = vrot.lane.b32.xlu0 %v292, 126
      %v497 = vpop.permute.xlu0 %496
      %vm498 = vcmask 1031168
      %v499 = vsel %vm498, %v493, %v495
      %v500 = vsel %vm498, %v495, %v497
      %v502 = vsel %vm302, %v491, 0
      %v505 = vsel %vm306, %v499, 0
      %v508 = vsel %vm306, %v500, 0
      %v511 = vsel %vm306, %v497, 0
      %513 = vmatprep.subr.bf16.mxu0 %v508
      %514 = vmatpush1.bf16.msra.mxu0 %v505
      %515 = vmatprep.subr.bf16.mxu0 0
      %516 = vmatpush1.bf16.msra.mxu0 0
      %517 = vmatprep.subr.bf16.mxu0 0
      %518 = vmatpush1.bf16.msra.mxu0 0
      %519 = vmatprep.subr.bf16.mxu0 0
      %520 = vmatpush1.bf16.msra.mxu0 0
      %521 = vmatprep.subr.bf16.mxu0 0
      %522 = vmatpush1.bf16.msra.mxu0 0
      %523 = vmatprep.subr.bf16.mxu0 0
      %524 = vmatpush1.bf16.msra.mxu0 0
      %525 = vmatprep.subr.bf16.mxu0 0
      %526 = vmatpush1.bf16.msra.mxu0 0
      %527 = vmatprep.subr.bf16.mxu0 0
      %528 = vmatpush1.bf16.msra.mxu0 0
      %529 = vmatprep.subr.bf16.mxu0 0
      %530 = vmatpush1.bf16.msra.mxu0 0
      %531 = vmatprep.subr.bf16.mxu0 0
      %532 = vmatpush1.bf16.msra.mxu0 0
      %533 = vmatprep.subr.bf16.mxu0 0
      %534 = vmatpush1.bf16.msra.mxu0 0
      %535 = vmatprep.subr.bf16.mxu0 0
      %536 = vmatpush1.bf16.msra.mxu0 0
      %537 = vmatprep.subr.bf16.mxu0 0
      %538 = vmatpush1.bf16.msra.mxu0 0
      %539 = vmatprep.subr.bf16.mxu0 0
      %540 = vmatpush1.bf16.msra.mxu0 0
      %541 = vmatprep.subr.bf16.mxu0 0
      %542 = vmatpush1.bf16.msra.mxu0 0
      %543 = vmatprep.subr.bf16.mxu0 0
      %544 = vmatpush1.bf16.msra.mxu0 0
      %545 = vmatprep.mubr.bf16.mxu0 0
      %546 = vmatmul.mubr.bf16.gmra.mrb[0].mxu0 %v502
      %v547 = vpop.f32.mrb[0].mxu0
      %v548 = vadd.f32 0.0, %v547
      %v549 = vpop.f32.mrb[0].mxu0
      %v550 = vadd.f32 0.0, %v549
      %v551 = vpop.f32.mrb[0].mxu0
      %v552 = vpop.f32.mrb[0].mxu0
      %553 = vdwg.mxu0
      %554 = vmatprep.subr.bf16.mxu0 0
      %555 = vmatpush1.bf16.msra.mxu0 %v511
      %556 = vmatprep.subr.bf16.mxu0 0
      %557 = vmatpush1.bf16.msra.mxu0 0
      %558 = vmatprep.subr.bf16.mxu0 0
      %559 = vmatpush1.bf16.msra.mxu0 0
      %560 = vmatprep.subr.bf16.mxu0 0
      %561 = vmatpush1.bf16.msra.mxu0 0
      %562 = vmatprep.subr.bf16.mxu0 0
      %563 = vmatpush1.bf16.msra.mxu0 0
      %564 = vmatprep.subr.bf16.mxu0 0
      %565 = vmatpush1.bf16.msra.mxu0 0
      %566 = vmatprep.subr.bf16.mxu0 0
      %567 = vmatpush1.bf16.msra.mxu0 0
      %568 = vmatprep.subr.bf16.mxu0 0
      %569 = vmatpush1.bf16.msra.mxu0 0
      %570 = vmatprep.subr.bf16.mxu0 0
      %571 = vmatpush1.bf16.msra.mxu0 0
      %572 = vmatprep.subr.bf16.mxu0 0
      %573 = vmatpush1.bf16.msra.mxu0 0
      %574 = vmatprep.subr.bf16.mxu0 0
      %575 = vmatpush1.bf16.msra.mxu0 0
      %576 = vmatprep.subr.bf16.mxu0 0
      %577 = vmatpush1.bf16.msra.mxu0 0
      %578 = vmatprep.subr.bf16.mxu0 0
      %579 = vmatpush1.bf16.msra.mxu0 0
      %580 = vmatprep.subr.bf16.mxu0 0
      %581 = vmatpush1.bf16.msra.mxu0 0
      %582 = vmatprep.subr.bf16.mxu0 0
      %583 = vmatpush1.bf16.msra.mxu0 0
      %584 = vmatprep.subr.bf16.mxu0 0
      %585 = vmatpush1.bf16.msra.mxu0 0
      %586 = vmatprep.mubr.bf16.mxu0 0
      %587 = vmatmul.mubr.bf16.gmra.mrb[0].mxu0 %v502
      %v588 = vpop.f32.mrb[0].mxu0
      %v589 = vadd.f32 0.0, %v588
      %v590 = vpop.f32.mrb[0].mxu0
      %v591 = vpop.f32.mrb[0].mxu0
      %v592 = vpop.f32.mrb[0].mxu0
      %593 = vdwg.mxu0
      %v594 = vadd.f32 %v444, %v548
      %v595 = vadd.f32 %v446, %v550
      %v596 = vadd.f32 %v485, %v589
      %s597 = scalar_lea.vmem %s1, 12
      %v598 = vld [vmem:[%s597] sm:$0xf]
      %599 = vrot.lane.b32.xlu0 %v290, 110
      %v600 = vpop.permute.xlu0 %599
      %601 = vrot.lane.b32.xlu0 %v291, 110
      %v602 = vpop.permute.xlu0 %601
      %603 = vrot.lane.b32.xlu0 %v292, 110
      %v604 = vpop.permute.xlu0 %603
      %vm605 = vcmask 900096
      %v606 = vsel %vm605, %v600, %v602
      %v607 = vsel %vm605, %v602, %v604
      %v609 = vsel %vm302, %v598, 0
      %v612 = vsel %vm306, %v606, 0
      %v615 = vsel %vm306, %v607, 0
      %v618 = vsel %vm306, %v604, 0
      %620 = vmatprep.subr.bf16.mxu0 %v615
      %621 = vmatpush1.bf16.msra.mxu0 %v612
      %622 = vmatprep.subr.bf16.mxu0 0
      %623 = vmatpush1.bf16.msra.mxu0 0
      %624 = vmatprep.subr.bf16.mxu0 0
      %625 = vmatpush1.bf16.msra.mxu0 0
      %626 = vmatprep.subr.bf16.mxu0 0
      %627 = vmatpush1.bf16.msra.mxu0 0
      %628 = vmatprep.subr.bf16.mxu0 0
      %629 = vmatpush1.bf16.msra.mxu0 0
      %630 = vmatprep.subr.bf16.mxu0 0
      %631 = vmatpush1.bf16.msra.mxu0 0
      %632 = vmatprep.subr.bf16.mxu0 0
      %633 = vmatpush1.bf16.msra.mxu0 0
      %634 = vmatprep.subr.bf16.mxu0 0
      %635 = vmatpush1.bf16.msra.mxu0 0
      %636 = vmatprep.subr.bf16.mxu0 0
      %637 = vmatpush1.bf16.msra.mxu0 0
      %638 = vmatprep.subr.bf16.mxu0 0
      %639 = vmatpush1.bf16.msra.mxu0 0
      %640 = vmatprep.subr.bf16.mxu0 0
      %641 = vmatpush1.bf16.msra.mxu0 0
      %642 = vmatprep.subr.bf16.mxu0 0
      %643 = vmatpush1.bf16.msra.mxu0 0
      %644 = vmatprep.subr.bf16.mxu0 0
      %645 = vmatpush1.bf16.msra.mxu0 0
      %646 = vmatprep.subr.bf16.mxu0 0
      %647 = vmatpush1.bf16.msra.mxu0 0
      %648 = vmatprep.subr.bf16.mxu0 0
      %649 = vmatpush1.bf16.msra.mxu0 0
      %650 = vmatprep.subr.bf16.mxu0 0
      %651 = vmatpush1.bf16.msra.mxu0 0
      %652 = vmatprep.mubr.bf16.mxu0 0
      %653 = vmatmul.mubr.bf16.gmra.mrb[0].mxu0 %v609
      %v654 = vpop.f32.mrb[0].mxu0
      %v655 = vadd.f32 0.0, %v654
      %v656 = vpop.f32.mrb[0].mxu0
      %v657 = vadd.f32 0.0, %v656
      %v658 = vpop.f32.mrb[0].mxu0
      %v659 = vpop.f32.mrb[0].mxu0
      %660 = vdwg.mxu0
      %661 = vmatprep.subr.bf16.mxu0 0
      %662 = vmatpush1.bf16.msra.mxu0 %v618
      %663 = vmatprep.subr.bf16.mxu0 0
      %664 = vmatpush1.bf16.msra.mxu0 0
      %665 = vmatprep.subr.bf16.mxu0 0
      %666 = vmatpush1.bf16.msra.mxu0 0
      %667 = vmatprep.subr.bf16.mxu0 0
      %668 = vmatpush1.bf16.msra.mxu0 0
      %669 = vmatprep.subr.bf16.mxu0 0
      %670 = vmatpush1.bf16.msra.mxu0 0
      %671 = vmatprep.subr.bf16.mxu0 0
      %672 = vmatpush1.bf16.msra.mxu0 0
      %673 = vmatprep.subr.bf16.mxu0 0
      %674 = vmatpush1.bf16.msra.mxu0 0
      %675 = vmatprep.subr.bf16.mxu0 0
      %676 = vmatpush1.bf16.msra.mxu0 0
      %677 = vmatprep.subr.bf16.mxu0 0
      %678 = vmatpush1.bf16.msra.mxu0 0
      %679 = vmatprep.subr.bf16.mxu0 0
      %680 = vmatpush1.bf16.msra.mxu0 0
      %681 = vmatprep.subr.bf16.mxu0 0
      %682 = vmatpush1.bf16.msra.mxu0 0
      %683 = vmatprep.subr.bf16.mxu0 0
      %684 = vmatpush1.bf16.msra.mxu0 0
      %685 = vmatprep.subr.bf16.mxu0 0
      %686 = vmatpush1.bf16.msra.mxu0 0
      %687 = vmatprep.subr.bf16.mxu0 0
      %688 = vmatpush1.bf16.msra.mxu0 0
      %689 = vmatprep.subr.bf16.mxu0 0
      %690 = vmatpush1.bf16.msra.mxu0 0
      %691 = vmatprep.subr.bf16.mxu0 0
      %692 = vmatpush1.bf16.msra.mxu0 0
      %693 = vmatprep.mubr.bf16.mxu0 0
      %694 = vmatmul.mubr.bf16.gmra.mrb[0].mxu0 %v609
      %v695 = vpop.f32.mrb[0].mxu0
      %v696 = vadd.f32 0.0, %v695
      %v697 = vpop.f32.mrb[0].mxu0
      %v698 = vpop.f32.mrb[0].mxu0
      %v699 = vpop.f32.mrb[0].mxu0
      %700 = vdwg.mxu0
      %v701 = vadd.f32 %v594, %v655
      %v702 = vadd.f32 %v595, %v657
      %v703 = vadd.f32 %v596, %v696
      %s704 = scalar_lea.vmem %s1, 16
      %v705 = vld [vmem:[%s704] sm:$0xf]
      %706 = vrot.lane.b32.xlu0 %v290, 109
      %v707 = vpop.permute.xlu0 %706
      %708 = vrot.lane.b32.xlu0 %v291, 109
      %v709 = vpop.permute.xlu0 %708
      %710 = vrot.lane.b32.xlu0 %v292, 109
      %v711 = vpop.permute.xlu0 %710
      %vm712 = vcmask 891904
      %v713 = vsel %vm712, %v707, %v709
      %v714 = vsel %vm712, %v709, %v711
      %v716 = vsel %vm302, %v705, 0
      %v719 = vsel %vm306, %v713, 0
      %v722 = vsel %vm306, %v714, 0
      %v725 = vsel %vm306, %v711, 0
      %727 = vmatprep.subr.bf16.mxu0 %v722
      %728 = vmatpush1.bf16.msra.mxu0 %v719
      %729 = vmatprep.subr.bf16.mxu0 0
      %730 = vmatpush1.bf16.msra.mxu0 0
      %731 = vmatprep.subr.bf16.mxu0 0
      %732 = vmatpush1.bf16.msra.mxu0 0
      %733 = vmatprep.subr.bf16.mxu0 0
      %734 = vmatpush1.bf16.msra.mxu0 0
      %735 = vmatprep.subr.bf16.mxu0 0
      %736 = vmatpush1.bf16.msra.mxu0 0
      %737 = vmatprep.subr.bf16.mxu0 0
      %738 = vmatpush1.bf16.msra.mxu0 0
      %739 = vmatprep.subr.bf16.mxu0 0
      %740 = vmatpush1.bf16.msra.mxu0 0
      %741 = vmatprep.subr.bf16.mxu0 0
      %742 = vmatpush1.bf16.msra.mxu0 0
      %743 = vmatprep.subr.bf16.mxu0 0
      %744 = vmatpush1.bf16.msra.mxu0 0
      %745 = vmatprep.subr.bf16.mxu0 0
      %746 = vmatpush1.bf16.msra.mxu0 0
      %747 = vmatprep.subr.bf16.mxu0 0
      %748 = vmatpush1.bf16.msra.mxu0 0
      %749 = vmatprep.subr.bf16.mxu0 0
      %750 = vmatpush1.bf16.msra.mxu0 0
      %751 = vmatprep.subr.bf16.mxu0 0
      %752 = vmatpush1.bf16.msra.mxu0 0
      %753 = vmatprep.subr.bf16.mxu0 0
      %754 = vmatpush1.bf16.msra.mxu0 0
      %755 = vmatprep.subr.bf16.mxu0 0
      %756 = vmatpush1.bf16.msra.mxu0 0
      %757 = vmatprep.subr.bf16.mxu0 0
      %758 = vmatpush1.bf16.msra.mxu0 0
      %759 = vmatprep.mubr.bf16.mxu0 0
      %760 = vmatmul.mubr.bf16.gmra.mrb[0].mxu0 %v716
      %v761 = vpop.f32.mrb[0].mxu0
      %v762 = vadd.f32 0.0, %v761
      %v763 = vpop.f32.mrb[0].mxu0
      %v764 = vadd.f32 0.0, %v763
      %v765 = vpop.f32.mrb[0].mxu0
      %v766 = vpop.f32.mrb[0].mxu0
      %767 = vdwg.mxu0
      %768 = vmatprep.subr.bf16.mxu0 0
      %769 = vmatpush1.bf16.msra.mxu0 %v725
      %770 = vmatprep.subr.bf16.mxu0 0
      %771 = vmatpush1.bf16.msra.mxu0 0
      %772 = vmatprep.subr.bf16.mxu0 0
      %773 = vmatpush1.bf16.msra.mxu0 0
      %774 = vmatprep.subr.bf16.mxu0 0
      %775 = vmatpush1.bf16.msra.mxu0 0
      %776 = vmatprep.subr.bf16.mxu0 0
      %777 = vmatpush1.bf16.msra.mxu0 0
      %778 = vmatprep.subr.bf16.mxu0 0
      %779 = vmatpush1.bf16.msra.mxu0 0
      %780 = vmatprep.subr.bf16.mxu0 0
      %781 = vmatpush1.bf16.msra.mxu0 0
      %782 = vmatprep.subr.bf16.mxu0 0
      %783 = vmatpush1.bf16.msra.mxu0 0
      %784 = vmatprep.subr.bf16.mxu0 0
      %785 = vmatpush1.bf16.msra.mxu0 0
      %786 = vmatprep.subr.bf16.mxu0 0
      %787 = vmatpush1.bf16.msra.mxu0 0
      %788 = vmatprep.subr.bf16.mxu0 0
      %789 = vmatpush1.bf16.msra.mxu0 0
      %790 = vmatprep.subr.bf16.mxu0 0
      %791 = vmatpush1.bf16.msra.mxu0 0
      %792 = vmatprep.subr.bf16.mxu0 0
      %793 = vmatpush1.bf16.msra.mxu0 0
      %794 = vmatprep.subr.bf16.mxu0 0
      %795 = vmatpush1.bf16.msra.mxu0 0
      %796 = vmatprep.subr.bf16.mxu0 0
      %797 = vmatpush1.bf16.msra.mxu0 0
      %798 = vmatprep.subr.bf16.mxu0 0
      %799 = vmatpush1.bf16.msra.mxu0 0
      %800 = vmatprep.mubr.bf16.mxu0 0
      %801 = vmatmul.mubr.bf16.gmra.mrb[0].mxu0 %v716
      %v802 = vpop.f32.mrb[0].mxu0
      %v803 = vadd.f32 0.0, %v802
      %v804 = vpop.f32.mrb[0].mxu0
      %v805 = vpop.f32.mrb[0].mxu0
      %v806 = vpop.f32.mrb[0].mxu0
      %807 = vdwg.mxu0
      %v808 = vadd.f32 %v701, %v762
      %v809 = vadd.f32 %v702, %v764
      %v810 = vadd.f32 %v703, %v803
      %s811 = scalar_lea.vmem %s1, 20
      %v812 = vld [vmem:[%s811] sm:$0xf]
      %813 = vrot.lane.b32.xlu0 %v290, 108
      %v814 = vpop.permute.xlu0 %813
      %815 = vrot.lane.b32.xlu0 %v291, 108
      %v816 = vpop.permute.xlu0 %815
      %817 = vrot.lane.b32.xlu0 %v292, 108
      %v818 = vpop.permute.xlu0 %817
      %vm819 = vcmask 883712
      %v820 = vsel %vm819, %v814, %v816
      %v821 = vsel %vm819, %v816, %v818
      %v823 = vsel %vm302, %v812, 0
      %v826 = vsel %vm306, %v820, 0
      %v829 = vsel %vm306, %v821, 0
      %v832 = vsel %vm306, %v818, 0
      %834 = vmatprep.subr.bf16.mxu0 %v829
      %835 = vmatpush1.bf16.msra.mxu0 %v826
      %836 = vmatprep.subr.bf16.mxu0 0
      %837 = vmatpush1.bf16.msra.mxu0 0
      %838 = vmatprep.subr.bf16.mxu0 0
      %839 = vmatpush1.bf16.msra.mxu0 0
      %840 = vmatprep.subr.bf16.mxu0 0
      %841 = vmatpush1.bf16.msra.mxu0 0
      %842 = vmatprep.subr.bf16.mxu0 0
      %843 = vmatpush1.bf16.msra.mxu0 0
      %844 = vmatprep.subr.bf16.mxu0 0
      %845 = vmatpush1.bf16.msra.mxu0 0
      %846 = vmatprep.subr.bf16.mxu0 0
      %847 = vmatpush1.bf16.msra.mxu0 0
      %848 = vmatprep.subr.bf16.mxu0 0
      %849 = vmatpush1.bf16.msra.mxu0 0
      %850 = vmatprep.subr.bf16.mxu0 0
      %851 = vmatpush1.bf16.msra.mxu0 0
      %852 = vmatprep.subr.bf16.mxu0 0
      %853 = vmatpush1.bf16.msra.mxu0 0
      %854 = vmatprep.subr.bf16.mxu0 0
      %855 = vmatpush1.bf16.msra.mxu0 0
      %856 = vmatprep.subr.bf16.mxu0 0
      %857 = vmatpush1.bf16.msra.mxu0 0
      %858 = vmatprep.subr.bf16.mxu0 0
      %859 = vmatpush1.bf16.msra.mxu0 0
      %860 = vmatprep.subr.bf16.mxu0 0
      %861 = vmatpush1.bf16.msra.mxu0 0
      %862 = vmatprep.subr.bf16.mxu0 0
      %863 = vmatpush1.bf16.msra.mxu0 0
      %864 = vmatprep.subr.bf16.mxu0 0
      %865 = vmatpush1.bf16.msra.mxu0 0
      %866 = vmatprep.mubr.bf16.mxu0 0
      %867 = vmatmul.mubr.bf16.gmra.mrb[0].mxu0 %v823
      %v868 = vpop.f32.mrb[0].mxu0
      %v869 = vadd.f32 0.0, %v868
      %v870 = vpop.f32.mrb[0].mxu0
      %v871 = vadd.f32 0.0, %v870
      %v872 = vpop.f32.mrb[0].mxu0
      %v873 = vpop.f32.mrb[0].mxu0
      %874 = vdwg.mxu0
      %875 = vmatprep.subr.bf16.mxu0 0
      %876 = vmatpush1.bf16.msra.mxu0 %v832
      %877 = vmatprep.subr.bf16.mxu0 0
      %878 = vmatpush1.bf16.msra.mxu0 0
      %879 = vmatprep.subr.bf16.mxu0 0
      %880 = vmatpush1.bf16.msra.mxu0 0
      %881 = vmatprep.subr.bf16.mxu0 0
      %882 = vmatpush1.bf16.msra.mxu0 0
      %883 = vmatprep.subr.bf16.mxu0 0
      %884 = vmatpush1.bf16.msra.mxu0 0
      %885 = vmatprep.subr.bf16.mxu0 0
      %886 = vmatpush1.bf16.msra.mxu0 0
      %887 = vmatprep.subr.bf16.mxu0 0
      %888 = vmatpush1.bf16.msra.mxu0 0
      %889 = vmatprep.subr.bf16.mxu0 0
      %890 = vmatpush1.bf16.msra.mxu0 0
      %891 = vmatprep.subr.bf16.mxu0 0
      %892 = vmatpush1.bf16.msra.mxu0 0
      %893 = vmatprep.subr.bf16.mxu0 0
      %894 = vmatpush1.bf16.msra.mxu0 0
      %895 = vmatprep.subr.bf16.mxu0 0
      %896 = vmatpush1.bf16.msra.mxu0 0
      %897 = vmatprep.subr.bf16.mxu0 0
      %898 = vmatpush1.bf16.msra.mxu0 0
      %899 = vmatprep.subr.bf16.mxu0 0
      %900 = vmatpush1.bf16.msra.mxu0 0
      %901 = vmatprep.subr.bf16.mxu0 0
      %902 = vmatpush1.bf16.msra.mxu0 0
      %903 = vmatprep.subr.bf16.mxu0 0
      %904 = vmatpush1.bf16.msra.mxu0 0
      %905 = vmatprep.subr.bf16.mxu0 0
      %906 = vmatpush1.bf16.msra.mxu0 0
      %907 = vmatprep.mubr.bf16.mxu0 0
      %908 = vmatmul.mubr.bf16.gmra.mrb[0].mxu0 %v823
      %v909 = vpop.f32.mrb[0].mxu0
      %v910 = vadd.f32 0.0, %v909
      %v911 = vpop.f32.mrb[0].mxu0
      %v912 = vpop.f32.mrb[0].mxu0
      %v913 = vpop.f32.mrb[0].mxu0
      %914 = vdwg.mxu0
      %v915 = vadd.f32 %v808, %v869
      %v916 = vadd.f32 %v809, %v871
      %v917 = vadd.f32 %v810, %v910
      %s918 = scalar_lea.vmem %s1, 24
      %v919 = vld [vmem:[%s918] sm:$0xf]
      %920 = vrot.lane.b32.xlu0 %v290, 92
      %v921 = vpop.permute.xlu0 %920
      %922 = vrot.lane.b32.xlu0 %v291, 92
      %v923 = vpop.permute.xlu0 %922
      %924 = vrot.lane.b32.xlu0 %v292, 92
      %v925 = vpop.permute.xlu0 %924
      %vm926 = vcmask 752640
      %v927 = vsel %vm926, %v921, %v923
      %v928 = vsel %vm926, %v923, %v925
      %v930 = vsel %vm302, %v919, 0
      %v933 = vsel %vm306, %v927, 0
      %v936 = vsel %vm306, %v928, 0
      %v939 = vsel %vm306, %v925, 0
      %941 = vmatprep.subr.bf16.mxu0 %v936
      %942 = vmatpush1.bf16.msra.mxu0 %v933
      %943 = vmatprep.subr.bf16.mxu0 0
      %944 = vmatpush1.bf16.msra.mxu0 0
      %945 = vmatprep.subr.bf16.mxu0 0
      %946 = vmatpush1.bf16.msra.mxu0 0
      %947 = vmatprep.subr.bf16.mxu0 0
      %948 = vmatpush1.bf16.msra.mxu0 0
      %949 = vmatprep.subr.bf16.mxu0 0
      %950 = vmatpush1.bf16.msra.mxu0 0
      %951 = vmatprep.subr.bf16.mxu0 0
      %952 = vmatpush1.bf16.msra.mxu0 0
      %953 = vmatprep.subr.bf16.mxu0 0
      %954 = vmatpush1.bf16.msra.mxu0 0
      %955 = vmatprep.subr.bf16.mxu0 0
      %956 = vmatpush1.bf16.msra.mxu0 0
      %957 = vmatprep.subr.bf16.mxu0 0
      %958 = vmatpush1.bf16.msra.mxu0 0
      %959 = vmatprep.subr.bf16.mxu0 0
      %960 = vmatpush1.bf16.msra.mxu0 0
      %961 = vmatprep.subr.bf16.mxu0 0
      %962 = vmatpush1.bf16.msra.mxu0 0
      %963 = vmatprep.subr.bf16.mxu0 0
      %964 = vmatpush1.bf16.msra.mxu0 0
      %965 = vmatprep.subr.bf16.mxu0 0
      %966 = vmatpush1.bf16.msra.mxu0 0
      %967 = vmatprep.subr.bf16.mxu0 0
      %968 = vmatpush1.bf16.msra.mxu0 0
      %969 = vmatprep.subr.bf16.mxu0 0
      %970 = vmatpush1.bf16.msra.mxu0 0
      %971 = vmatprep.subr.bf16.mxu0 0
      %972 = vmatpush1.bf16.msra.mxu0 0
      %973 = vmatprep.mubr.bf16.mxu0 0
      %974 = vmatmul.mubr.bf16.gmra.mrb[0].mxu0 %v930
      %v975 = vpop.f32.mrb[0].mxu0
      %v976 = vadd.f32 0.0, %v975
      %v977 = vpop.f32.mrb[0].mxu0
      %v978 = vadd.f32 0.0, %v977
      %v979 = vpop.f32.mrb[0].mxu0
      %v980 = vpop.f32.mrb[0].mxu0
      %981 = vdwg.mxu0
      %982 = vmatprep.subr.bf16.mxu0 0
      %983 = vmatpush1.bf16.msra.mxu0 %v939
      %984 = vmatprep.subr.bf16.mxu0 0
      %985 = vmatpush1.bf16.msra.mxu0 0
      %986 = vmatprep.subr.bf16.mxu0 0
      %987 = vmatpush1.bf16.msra.mxu0 0
      %988 = vmatprep.subr.bf16.mxu0 0
      %989 = vmatpush1.bf16.msra.mxu0 0
      %990 = vmatprep.subr.bf16.mxu0 0
      %991 = vmatpush1.bf16.msra.mxu0 0
      %992 = vmatprep.subr.bf16.mxu0 0
      %993 = vmatpush1.bf16.msra.mxu0 0
      %994 = vmatprep.subr.bf16.mxu0 0
      %995 = vmatpush1.bf16.msra.mxu0 0
      %996 = vmatprep.subr.bf16.mxu0 0
      %997 = vmatpush1.bf16.msra.mxu0 0
      %998 = vmatprep.subr.bf16.mxu0 0
      %999 = vmatpush1.bf16.msra.mxu0 0
      %1000 = vmatprep.subr.bf16.mxu0 0
      %1001 = vmatpush1.bf16.msra.mxu0 0
      %1002 = vmatprep.subr.bf16.mxu0 0
      %1003 = vmatpush1.bf16.msra.mxu0 0
      %1004 = vmatprep.subr.bf16.mxu0 0
      %1005 = vmatpush1.bf16.msra.mxu0 0
      %1006 = vmatprep.subr.bf16.mxu0 0
      %1007 = vmatpush1.bf16.msra.mxu0 0
      %1008 = vmatprep.subr.bf16.mxu0 0
      %1009 = vmatpush1.bf16.msra.mxu0 0
      %1010 = vmatprep.subr.bf16.mxu0 0
      %1011 = vmatpush1.bf16.msra.mxu0 0
      %1012 = vmatprep.subr.bf16.mxu0 0
      %1013 = vmatpush1.bf16.msra.mxu0 0
      %1014 = vmatprep.mubr.bf16.mxu0 0
      %1015 = vmatmul.mubr.bf16.gmra.mrb[0].mxu0 %v930
      %v1016 = vpop.f32.mrb[0].mxu0
      %v1017 = vadd.f32 0.0, %v1016
      %v1018 = vpop.f32.mrb[0].mxu0
      %v1019 = vpop.f32.mrb[0].mxu0
      %v1020 = vpop.f32.mrb[0].mxu0
      %1021 = vdwg.mxu0
      %v1022 = vadd.f32 %v915, %v976
      %v1023 = vadd.f32 %v916, %v978
      %v1024 = vadd.f32 %v917, %v1017
      %s1025 = scalar_lea.vmem %s1, 28
      %v1026 = vld [vmem:[%s1025] sm:$0xf]
      %1027 = vrot.lane.b32.xlu0 %v290, 91
      %v1028 = vpop.permute.xlu0 %1027
      %1029 = vrot.lane.b32.xlu0 %v291, 91
      %v1030 = vpop.permute.xlu0 %1029
      %1031 = vrot.lane.b32.xlu0 %v292, 91
      %v1032 = vpop.permute.xlu0 %1031
      %vm1033 = vcmask 744448
      %v1034 = vsel %vm1033, %v1028, %v1030
      %v1035 = vsel %vm1033, %v1030, %v1032
      %v1037 = vsel %vm302, %v1026, 0
      %v1040 = vsel %vm306, %v1034, 0
      %v1043 = vsel %vm306, %v1035, 0
      %v1046 = vsel %vm306, %v1032, 0
      %1048 = vmatprep.subr.bf16.mxu0 %v1043
      %1049 = vmatpush1.bf16.msra.mxu0 %v1040
      %1050 = vmatprep.subr.bf16.mxu0 0
      %1051 = vmatpush1.bf16.msra.mxu0 0
      %1052 = vmatprep.subr.bf16.mxu0 0
      %1053 = vmatpush1.bf16.msra.mxu0 0
      %1054 = vmatprep.subr.bf16.mxu0 0
      %1055 = vmatpush1.bf16.msra.mxu0 0
      %1056 = vmatprep.subr.bf16.mxu0 0
      %1057 = vmatpush1.bf16.msra.mxu0 0
      %1058 = vmatprep.subr.bf16.mxu0 0
      %1059 = vmatpush1.bf16.msra.mxu0 0
      %1060 = vmatprep.subr.bf16.mxu0 0
      %1061 = vmatpush1.bf16.msra.mxu0 0
      %1062 = vmatprep.subr.bf16.mxu0 0
      %1063 = vmatpush1.bf16.msra.mxu0 0
      %1064 = vmatprep.subr.bf16.mxu0 0
      %1065 = vmatpush1.bf16.msra.mxu0 0
      %1066 = vmatprep.subr.bf16.mxu0 0
      %1067 = vmatpush1.bf16.msra.mxu0 0
      %1068 = vmatprep.subr.bf16.mxu0 0
      %1069 = vmatpush1.bf16.msra.mxu0 0
      %1070 = vmatprep.subr.bf16.mxu0 0
      %1071 = vmatpush1.bf16.msra.mxu0 0
      %1072 = vmatprep.subr.bf16.mxu0 0
      %1073 = vmatpush1.bf16.msra.mxu0 0
      %1074 = vmatprep.subr.bf16.mxu0 0
      %1075 = vmatpush1.bf16.msra.mxu0 0
      %1076 = vmatprep.subr.bf16.mxu0 0
      %1077 = vmatpush1.bf16.msra.mxu0 0
      %1078 = vmatprep.subr.bf16.mxu0 0
      %1079 = vmatpush1.bf16.msra.mxu0 0
      %1080 = vmatprep.mubr.bf16.mxu0 0
      %1081 = vmatmul.mubr.bf16.gmra.mrb[0].mxu0 %v1037
      %v1082 = vpop.f32.mrb[0].mxu0
      %v1083 = vadd.f32 0.0, %v1082
      %v1084 = vpop.f32.mrb[0].mxu0
      %v1085 = vadd.f32 0.0, %v1084
      %v1086 = vpop.f32.mrb[0].mxu0
      %v1087 = vpop.f32.mrb[0].mxu0
      %1088 = vdwg.mxu0
      %1089 = vmatprep.subr.bf16.mxu0 0
      %1090 = vmatpush1.bf16.msra.mxu0 %v1046
      %1091 = vmatprep.subr.bf16.mxu0 0
      %1092 = vmatpush1.bf16.msra.mxu0 0
      %1093 = vmatprep.subr.bf16.mxu0 0
      %1094 = vmatpush1.bf16.msra.mxu0 0
      %1095 = vmatprep.subr.bf16.mxu0 0
      %1096 = vmatpush1.bf16.msra.mxu0 0
      %1097 = vmatprep.subr.bf16.mxu0 0
      %1098 = vmatpush1.bf16.msra.mxu0 0
      %1099 = vmatprep.subr.bf16.mxu0 0
      %1100 = vmatpush1.bf16.msra.mxu0 0
      %1101 = vmatprep.subr.bf16.mxu0 0
      %1102 = vmatpush1.bf16.msra.mxu0 0
      %1103 = vmatprep.subr.bf16.mxu0 0
      %1104 = vmatpush1.bf16.msra.mxu0 0
      %1105 = vmatprep.subr.bf16.mxu0 0
      %1106 = vmatpush1.bf16.msra.mxu0 0
      %1107 = vmatprep.subr.bf16.mxu0 0
      %1108 = vmatpush1.bf16.msra.mxu0 0
      %1109 = vmatprep.subr.bf16.mxu0 0
      %1110 = vmatpush1.bf16.msra.mxu0 0
      %1111 = vmatprep.subr.bf16.mxu0 0
      %1112 = vmatpush1.bf16.msra.mxu0 0
      %1113 = vmatprep.subr.bf16.mxu0 0
      %1114 = vmatpush1.bf16.msra.mxu0 0
      %1115 = vmatprep.subr.bf16.mxu0 0
      %1116 = vmatpush1.bf16.msra.mxu0 0
      %1117 = vmatprep.subr.bf16.mxu0 0
      %1118 = vmatpush1.bf16.msra.mxu0 0
      %1119 = vmatprep.subr.bf16.mxu0 0
      %1120 = vmatpush1.bf16.msra.mxu0 0
      %1121 = vmatprep.mubr.bf16.mxu0 0
      %1122 = vmatmul.mubr.bf16.gmra.mrb[0].mxu0 %v1037
      %v1123 = vpop.f32.mrb[0].mxu0
      %v1124 = vadd.f32 0.0, %v1123
      %v1125 = vpop.f32.mrb[0].mxu0
      %v1126 = vpop.f32.mrb[0].mxu0
      %v1127 = vpop.f32.mrb[0].mxu0
      %1128 = vdwg.mxu0
      %v1129 = vadd.f32 %v1022, %v1083
      %v1130 = vadd.f32 %v1023, %v1085
      %v1131 = vadd.f32 %v1024, %v1124
      %s1132 = scalar_lea.vmem %s1, 32
      %v1133 = vld [vmem:[%s1132] sm:$0xf]
      %1134 = vrot.lane.b32.xlu0 %v290, 90
      %v1135 = vpop.permute.xlu0 %1134
      %1136 = vrot.lane.b32.xlu0 %v291, 90
      %v1137 = vpop.permute.xlu0 %1136
      %1138 = vrot.lane.b32.xlu0 %v292, 90
      %v1139 = vpop.permute.xlu0 %1138
      %vm1140 = vcmask 736256
      %v1141 = vsel %vm1140, %v1135, %v1137
      %v1142 = vsel %vm1140, %v1137, %v1139
      %v1144 = vsel %vm302, %v1133, 0
      %v1147 = vsel %vm306, %v1141, 0
      %v1150 = vsel %vm306, %v1142, 0
      %v1153 = vsel %vm306, %v1139, 0
      %1155 = vmatprep.subr.bf16.mxu0 %v1150
      %1156 = vmatpush1.bf16.msra.mxu0 %v1147
      %1157 = vmatprep.subr.bf16.mxu0 0
      %1158 = vmatpush1.bf16.msra.mxu0 0
      %1159 = vmatprep.subr.bf16.mxu0 0
      %1160 = vmatpush1.bf16.msra.mxu0 0
      %1161 = vmatprep.subr.bf16.mxu0 0
      %1162 = vmatpush1.bf16.msra.mxu0 0
      %1163 = vmatprep.subr.bf16.mxu0 0
      %1164 = vmatpush1.bf16.msra.mxu0 0
      %1165 = vmatprep.subr.bf16.mxu0 0
      %1166 = vmatpush1.bf16.msra.mxu0 0
      %1167 = vmatprep.subr.bf16.mxu0 0
      %1168 = vmatpush1.bf16.msra.mxu0 0
      %1169 = vmatprep.subr.bf16.mxu0 0
      %1170 = vmatpush1.bf16.msra.mxu0 0
      %1171 = vmatprep.subr.bf16.mxu0 0
      %1172 = vmatpush1.bf16.msra.mxu0 0
      %1173 = vmatprep.subr.bf16.mxu0 0
      %1174 = vmatpush1.bf16.msra.mxu0 0
      %1175 = vmatprep.subr.bf16.mxu0 0
      %1176 = vmatpush1.bf16.msra.mxu0 0
      %1177 = vmatprep.subr.bf16.mxu0 0
      %1178 = vmatpush1.bf16.msra.mxu0 0
      %1179 = vmatprep.subr.bf16.mxu0 0
      %1180 = vmatpush1.bf16.msra.mxu0 0
      %1181 = vmatprep.subr.bf16.mxu0 0
      %1182 = vmatpush1.bf16.msra.mxu0 0
      %1183 = vmatprep.subr.bf16.mxu0 0
      %1184 = vmatpush1.bf16.msra.mxu0 0
      %1185 = vmatprep.subr.bf16.mxu0 0
      %1186 = vmatpush1.bf16.msra.mxu0 0
      %1187 = vmatprep.mubr.bf16.mxu0 0
      %1188 = vmatmul.mubr.bf16.gmra.mrb[0].mxu0 %v1144
      %v1189 = vpop.f32.mrb[0].mxu0
      %v1190 = vadd.f32 0.0, %v1189
      %v1191 = vpop.f32.mrb[0].mxu0
      %v1192 = vadd.f32 0.0, %v1191
      %v1193 = vpop.f32.mrb[0].mxu0
      %v1194 = vpop.f32.mrb[0].mxu0
      %1195 = vdwg.mxu0
      %1196 = vmatprep.subr.bf16.mxu0 0
      %1197 = vmatpush1.bf16.msra.mxu0 %v1153
      %1198 = vmatprep.subr.bf16.mxu0 0
      %1199 = vmatpush1.bf16.msra.mxu0 0
      %1200 = vmatprep.subr.bf16.mxu0 0
      %1201 = vmatpush1.bf16.msra.mxu0 0
      %1202 = vmatprep.subr.bf16.mxu0 0
      %1203 = vmatpush1.bf16.msra.mxu0 0
      %1204 = vmatprep.subr.bf16.mxu0 0
      %1205 = vmatpush1.bf16.msra.mxu0 0
      %1206 = vmatprep.subr.bf16.mxu0 0
      %1207 = vmatpush1.bf16.msra.mxu0 0
      %1208 = vmatprep.subr.bf16.mxu0 0
      %1209 = vmatpush1.bf16.msra.mxu0 0
      %1210 = vmatprep.subr.bf16.mxu0 0
      %1211 = vmatpush1.bf16.msra.mxu0 0
      %1212 = vmatprep.subr.bf16.mxu0 0
      %1213 = vmatpush1.bf16.msra.mxu0 0
      %1214 = vmatprep.subr.bf16.mxu0 0
      %1215 = vmatpush1.bf16.msra.mxu0 0
      %1216 = vmatprep.subr.bf16.mxu0 0
      %1217 = vmatpush1.bf16.msra.mxu0 0
      %1218 = vmatprep.subr.bf16.mxu0 0
      %1219 = vmatpush1.bf16.msra.mxu0 0
      %1220 = vmatprep.subr.bf16.mxu0 0
      %1221 = vmatpush1.bf16.msra.mxu0 0
      %1222 = vmatprep.subr.bf16.mxu0 0
      %1223 = vmatpush1.bf16.msra.mxu0 0
      %1224 = vmatprep.subr.bf16.mxu0 0
      %1225 = vmatpush1.bf16.msra.mxu0 0
      %1226 = vmatprep.subr.bf16.mxu0 0
      %1227 = vmatpush1.bf16.msra.mxu0 0
      %1228 = vmatprep.mubr.bf16.mxu0 0
      %1229 = vmatmul.mubr.bf16.gmra.mrb[0].mxu0 %v1144
      %v1230 = vpop.f32.mrb[0].mxu0
      %v1231 = vadd.f32 0.0, %v1230
      %v1232 = vpop.f32.mrb[0].mxu0
      %v1233 = vpop.f32.mrb[0].mxu0
      %v1234 = vpop.f32.mrb[0].mxu0
      %1235 = vdwg.mxu0
      %v1236 = vadd.f32 %v1129, %v1190
      %v1237 = vadd.f32 %v1130, %v1192
      %v1238 = vadd.f32 %v1131, %v1231
      %v1239 = vld [vmem:[%s2] sm:$0xff]
      %1241 = vset.pattern.permute.xlu0 0
      %1242 = vperm.xlu0 %1241, %v1239
      %v1243 = vpop.permute.xlu0 %1242
      %v1245 = vadd.f32 %v1236, %v1243
      %v1246 = vadd.f32 %v1237, %v1243
      %v1247 = vadd.f32 %v1238, %v1243
      %v1248 = vmax.f32 %v1245, 0.0
      %v1249 = vmax.f32 %v1246, 0.0
      %v1250 = vmax.f32 %v1247, 0.0
      %v1251 = vrot.slane %v1248, 4
      %v1252 = vadd.f32 %v1248, %v1251
      %v1253 = vrot.slane %v1252, 2
      %v1254 = vadd.f32 %v1252, %v1253
      %v1255 = vrot.slane %v1254, 1
      %v1256 = vadd.f32 %v1254, %v1255
      %v1257 = vrot.slane %v1249, 4
      %v1258 = vadd.f32 %v1249, %v1257
      %v1259 = vrot.slane %v1258, 2
      %v1260 = vadd.f32 %v1258, %v1259
      %v1261 = vrot.slane %v1260, 1
      %v1262 = vadd.f32 %v1260, %v1261
      %vm1263 = vcmask 261120
      %v1264 = vsel %vm1263, %v1250, 0.0
      %v1265 = vrot.slane %v1264, 4
      %v1266 = vadd.f32 %v1264, %v1265
      %v1267 = vrot.slane %v1266, 2
      %v1268 = vadd.f32 %v1266, %v1267
      %v1269 = vrot.slane %v1268, 1
      %v1270 = vadd.f32 %v1268, %v1269
      %v1271 = vrcp.pop 8.0
      %v1272 = vmul.f32 %v1256, %v1271
      %v1273 = vmul.f32 %v1262, %v1271
      %v1274 = vmul.f32 %v1270, %v1271
      %v1275 = vsub.f32 %v1248, %v1272
      %v1276 = vsub.f32 %v1249, %v1273
      %v1277 = vsub.f32 %v1250, %v1274
      %v1278 = vmul.f32 %v1275, %v1275
      %v1279 = vmul.f32 %v1276, %v1276
      %v1280 = vmul.f32 %v1277, %v1277
      %v1281 = vrot.slane %v1278, 4
      %v1282 = vadd.f32 %v1278, %v1281
      %v1283 = vrot.slane %v1282, 2
      %v1284 = vadd.f32 %v1282, %v1283
      %v1285 = vrot.slane %v1284, 1
      %v1286 = vadd.f32 %v1284, %v1285
      %v1287 = vrot.slane %v1279, 4
      %v1288 = vadd.f32 %v1279, %v1287
      %v1289 = vrot.slane %v1288, 2
      %v1290 = vadd.f32 %v1288, %v1289
      %v1291 = vrot.slane %v1290, 1
      %v1292 = vadd.f32 %v1290, %v1291
      %v1293 = vsel %vm1263, %v1280, 0.0
      %v1294 = vrot.slane %v1293, 4
      %v1295 = vadd.f32 %v1293, %v1294
      %v1296 = vrot.slane %v1295, 2
      %v1297 = vadd.f32 %v1295, %v1296
      %v1298 = vrot.slane %v1297, 1
      %v1299 = vadd.f32 %v1297, %v1298
      %v1300 = vmul.f32 %v1286, %v1271
      %v1301 = vmul.f32 %v1292, %v1271
      %v1302 = vmul.f32 %v1299, %v1271
      %v1303 = vadd.f32 %v1300, 1e-05
      %v1304 = vadd.f32 %v1301, 1e-05
      %v1305 = vadd.f32 %v1302, 1e-05
      %v1306 = vrsqrt.pop %v1303
      %v1307 = vrsqrt.pop %v1304
      %v1308 = vrsqrt.pop %v1305
      %v1309 = vmul.f32 %v1275, %v1306
      %v1310 = vmul.f32 %v1276, %v1307
      %v1311 = vmul.f32 %v1277, %v1308
      %v1312 = vld [vmem:[%s3] sm:$0xff]
      %1314 = vset.pattern.permute.xlu0 0
      %1315 = vperm.xlu0 %1314, %v1312
      %v1316 = vpop.permute.xlu0 %1315
      %v1318 = vmul.f32 %v1309, %v1316
      %v1319 = vmul.f32 %v1310, %v1316
      %v1320 = vmul.f32 %v1311, %v1316
      %v1321 = vld [vmem:[%s4] sm:$0xff]
      %1323 = vset.pattern.permute.xlu0 0
      %1324 = vperm.xlu0 %1323, %v1321
      %v1325 = vpop.permute.xlu0 %1324
      %v1327 = vadd.f32 %v1318, %v1325
      %v1328 = vadd.f32 %v1319, %v1325
      %v1329 = vadd.f32 %v1320, %v1325
      %v1330 = vlaneseq
      %v1331 = vand.u32 %v1330, 127
      %v1332 = vadd.s32 %v1331, 128
      %v1333 = vadd.s32 %v1331, 256
      %vm1334 = vcmp.lt.s32.totalorder %v1331, 0
      %v1335 = vsub.s32 0, %v1331
      %v1336 = vsel %vm1334, %v1335, %v1331
      %v1337 = vmul.u32.u64.compose %v1336, 3817748708
      %v1338 = vextract.low.u32 %v1337
      %v1339 = vextract.high.u32 %v1337
      %v1340 = vshrl.u32 %v1339, 4
      %v1341 = vmul.u32 %v1340, 18
      %v1342 = vsub.s32 %v1336, %v1341
      %v1343 = vsub.s32 0, %v1342
      %v1344 = vsel %vm1334, %v1343, %v1342
      %vm1345 = vcmp.lt.s32.totalorder %v1332, 0
      %v1346 = vsub.s32 0, %v1332
      %v1347 = vsel %vm1345, %v1346, %v1332
      %v1348 = vmul.u32.u64.compose %v1347, 3817748708
      %v1349 = vextract.low.u32 %v1348
      %v1350 = vextract.high.u32 %v1348
      %v1351 = vshrl.u32 %v1350, 4
      %v1352 = vmul.u32 %v1351, 18
      %v1353 = vsub.s32 %v1347, %v1352
      %v1354 = vsub.s32 0, %v1353
      %v1355 = vsel %vm1345, %v1354, %v1353
      %vm1356 = vcmp.lt.s32.totalorder %v1333, 0
      %v1357 = vsub.s32 0, %v1333
      %v1358 = vsel %vm1356, %v1357, %v1333
      %v1359 = vmul.u32.u64.compose %v1358, 3817748708
      %v1360 = vextract.low.u32 %v1359
      %v1361 = vextract.high.u32 %v1359
      %v1362 = vshrl.u32 %v1361, 4
      %v1363 = vmul.u32 %v1362, 18
      %v1364 = vsub.s32 %v1358, %v1363
      %v1365 = vsub.s32 0, %v1364
      %v1366 = vsel %vm1356, %v1365, %v1364
      %vm1367 = vcmp.ne.s32.totalorder %v1344, 0
      %vm1368 = vcmp.ne.s32.totalorder %v1355, 0
      %vm1369 = vcmp.ne.s32.totalorder %v1366, 0
      %vm1370 = vcmp.lt.s32.totalorder %v1344, 0
      %vm1371 = vcmp.lt.s32.totalorder %v1355, 0
      %vm1372 = vcmp.lt.s32.totalorder %v1366, 0
      %vm1373 = vmand %vm1370, %vm1367
      %vm1374 = vmand %vm1371, %vm1368
      %vm1375 = vmand %vm1372, %vm1369
      %v1376 = vadd.s32 %v1344, 18
      %v1377 = vadd.s32 %v1355, 18
      %v1378 = vadd.s32 %v1366, 18
      %v1379 = vsel %vm1373, %v1376, %v1344
      %v1380 = vsel %vm1374, %v1377, %v1355
      %v1381 = vsel %vm1375, %v1378, %v1366
      %vm1382 = vcmp.lt.s32.totalorder %v1379, 16
      %vm1383 = vcmp.lt.s32.totalorder %v1380, 16
      %vm1384 = vcmp.lt.s32.totalorder %v1381, 16
      %v1385 = vsel %vm1382, %v1327, 0.0
      %v1386 = vsel %vm1383, %v1328, 0.0
      %v1387 = vsel %vm1384, %v1329, 0.0
      %vm1388 = vcmask 154624
      %1389 = vst.msk [vmem:[#allocation2] sm:$0xff] %vm1388, 0.0
      %vm1390 = vcmask 572824
      %1391 = vst.msk [vmem:[#allocation2 + $0x10] sm:$0xff] %vm1390, 0.0
      %1395 = vrot.lane.b32.xlu0 %v1385, 19
      %v1396 = vpop.permute.xlu0 %1395
      %1397 = vrot.lane.b32.xlu0 %v1386, 19
      %v1398 = vpop.permute.xlu0 %1397
      %1399 = vrot.lane.b32.xlu0 %v1387, 19
      %v1400 = vpop.permute.xlu0 %1399
      %v1401 = vsel %vm1388, %v1396, %v1398
      %v1402 = vsel %vm1388, %v1398, %v1400
      %vm1406 = vcmask 1047704
      %1407 = vst.msk [vmem:[#allocation2] sm:$0xff] %vm1406, %v1396
      %1408 = vst [vmem:[#allocation2 + $0x8] sm:$0xff] %v1401
      %vm1409 = vcmask 416768
      %1410 = vst.msk [vmem:[#allocation2 + $0x10] sm:$0xff] %vm1409, %v1402
      %v1411 = vld [vmem:[%s5] sm:$0xf]
      %v1412 = vld [vmem:[#allocation2] sm:$0xff]
      %v1413 = vld [vmem:[#allocation2 + $0x8] sm:$0xff]
      %v1414 = vld [vmem:[#allocation2 + $0x10] sm:$0xff]
      %v1415 = vpack.c.bf16 %v1412, %v1412
      %v1416 = vpack.c.bf16 %v1413, %v1413
      %v1417 = vpack.c.bf16 %v1414, %v1414
      %s1418 = scalar_lea.vmem %s5, 4
      %v1419 = vld [vmem:[%s1418] sm:$0xf]
      %1423 = vrot.lane.b32.xlu0 %v1415, 127
      %v1424 = vpop.permute.xlu0 %1423
      %1425 = vrot.lane.b32.xlu0 %v1416, 127
      %v1426 = vpop.permute.xlu0 %1425
      %1427 = vrot.lane.b32.xlu0 %v1417, 127
      %v1428 = vpop.permute.xlu0 %1427
      %v1429 = vsel %vm299, %v1424, %v1426
      %v1430 = vsel %vm299, %v1426, %v1428
      %v1432 = vsel %vm302, %v1419, 0
      %v1435 = vsel %vm306, %v1429, 0
      %v1438 = vsel %vm306, %v1430, 0
      %v1441 = vsel %vm306, %v1428, 0
      %1443 = vmatprep.subr.bf16.mxu0 %v1438
      %1444 = vmatpush1.bf16.msra.mxu0 %v1435
      %1445 = vmatprep.subr.bf16.mxu0 0
      %1446 = vmatpush1.bf16.msra.mxu0 0
      %1447 = vmatprep.subr.bf16.mxu0 0
      %1448 = vmatpush1.bf16.msra.mxu0 0
      %1449 = vmatprep.subr.bf16.mxu0 0
      %1450 = vmatpush1.bf16.msra.mxu0 0
      %1451 = vmatprep.subr.bf16.mxu0 0
      %1452 = vmatpush1.bf16.msra.mxu0 0
      %1453 = vmatprep.subr.bf16.mxu0 0
      %1454 = vmatpush1.bf16.msra.mxu0 0
      %1455 = vmatprep.subr.bf16.mxu0 0
      %1456 = vmatpush1.bf16.msra.mxu0 0
      %1457 = vmatprep.subr.bf16.mxu0 0
      %1458 = vmatpush1.bf16.msra.mxu0 0
      %1459 = vmatprep.subr.bf16.mxu0 0
      %1460 = vmatpush1.bf16.msra.mxu0 0
      %1461 = vmatprep.subr.bf16.mxu0 0
      %1462 = vmatpush1.bf16.msra.mxu0 0
      %1463 = vmatprep.subr.bf16.mxu0 0
      %1464 = vmatpush1.bf16.msra.mxu0 0
      %1465 = vmatprep.subr.bf16.mxu0 0
      %1466 = vmatpush1.bf16.msra.mxu0 0
      %1467 = vmatprep.subr.bf16.mxu0 0
      %1468 = vmatpush1.bf16.msra.mxu0 0
      %1469 = vmatprep.subr.bf16.mxu0 0
      %1470 = vmatpush1.bf16.msra.mxu0 0
      %1471 = vmatprep.subr.bf16.mxu0 0
      %1472 = vmatpush1.bf16.msra.mxu0 0
      %1473 = vmatprep.subr.bf16.mxu0 0
      %1474 = vmatpush1.bf16.msra.mxu0 0
      %1475 = vmatprep.mubr.bf16.mxu0 0
      %1476 = vmatmul.mubr.bf16.gmra.mrb[0].mxu0 %v1432
      %v1477 = vpop.f32.mrb[0].mxu0
      %v1478 = vadd.f32 0.0, %v1477
      %v1479 = vpop.f32.mrb[0].mxu0
      %v1480 = vadd.f32 0.0, %v1479
      %v1481 = vpop.f32.mrb[0].mxu0
      %v1482 = vpop.f32.mrb[0].mxu0
      %1483 = vdwg.mxu0
      %1484 = vmatprep.subr.bf16.mxu0 0
      %1485 = vmatpush1.bf16.msra.mxu0 %v1441
      %1486 = vmatprep.subr.bf16.mxu0 0
      %1487 = vmatpush1.bf16.msra.mxu0 0
      %1488 = vmatprep.subr.bf16.mxu0 0
      %1489 = vmatpush1.bf16.msra.mxu0 0
      %1490 = vmatprep.subr.bf16.mxu0 0
      %1491 = vmatpush1.bf16.msra.mxu0 0
      %1492 = vmatprep.subr.bf16.mxu0 0
      %1493 = vmatpush1.bf16.msra.mxu0 0
      %1494 = vmatprep.subr.bf16.mxu0 0
      %1495 = vmatpush1.bf16.msra.mxu0 0
      %1496 = vmatprep.subr.bf16.mxu0 0
      %1497 = vmatpush1.bf16.msra.mxu0 0
      %1498 = vmatprep.subr.bf16.mxu0 0
      %1499 = vmatpush1.bf16.msra.mxu0 0
      %1500 = vmatprep.subr.bf16.mxu0 0
      %1501 = vmatpush1.bf16.msra.mxu0 0
      %1502 = vmatprep.subr.bf16.mxu0 0
      %1503 = vmatpush1.bf16.msra.mxu0 0
      %1504 = vmatprep.subr.bf16.mxu0 0
      %1505 = vmatpush1.bf16.msra.mxu0 0
      %1506 = vmatprep.subr.bf16.mxu0 0
      %1507 = vmatpush1.bf16.msra.mxu0 0
      %1508 = vmatprep.subr.bf16.mxu0 0
      %1509 = vmatpush1.bf16.msra.mxu0 0
      %1510 = vmatprep.subr.bf16.mxu0 0
      %1511 = vmatpush1.bf16.msra.mxu0 0
      %1512 = vmatprep.subr.bf16.mxu0 0
      %1513 = vmatpush1.bf16.msra.mxu0 0
      %1514 = vmatprep.subr.bf16.mxu0 0
      %1515 = vmatpush1.bf16.msra.mxu0 0
      %1516 = vmatprep.mubr.bf16.mxu0 0
      %1517 = vmatmul.mubr.bf16.gmra.mrb[0].mxu0 %v1432
      %v1518 = vpop.f32.mrb[0].mxu0
      %v1519 = vadd.f32 0.0, %v1518
      %v1520 = vpop.f32.mrb[0].mxu0
      %v1521 = vpop.f32.mrb[0].mxu0
      %v1522 = vpop.f32.mrb[0].mxu0
      %1523 = vdwg.mxu0
      %v1525 = vsel %vm302, %v1411, 0
      %v1528 = vsel %vm306, %v1415, 0
      %v1531 = vsel %vm306, %v1416, 0
      %v1534 = vsel %vm306, %v1417, 0
      %1536 = vmatprep.subr.bf16.mxu0 %v1531
      %1537 = vmatpush1.bf16.msra.mxu0 %v1528
      %1538 = vmatprep.subr.bf16.mxu0 0
      %1539 = vmatpush1.bf16.msra.mxu0 0
      %1540 = vmatprep.subr.bf16.mxu0 0
      %1541 = vmatpush1.bf16.msra.mxu0 0
      %1542 = vmatprep.subr.bf16.mxu0 0
      %1543 = vmatpush1.bf16.msra.mxu0 0
      %1544 = vmatprep.subr.bf16.mxu0 0
      %1545 = vmatpush1.bf16.msra.mxu0 0
      %1546 = vmatprep.subr.bf16.mxu0 0
      %1547 = vmatpush1.bf16.msra.mxu0 0
      %1548 = vmatprep.subr.bf16.mxu0 0
      %1549 = vmatpush1.bf16.msra.mxu0 0
      %1550 = vmatprep.subr.bf16.mxu0 0
      %1551 = vmatpush1.bf16.msra.mxu0 0
      %1552 = vmatprep.subr.bf16.mxu0 0
      %1553 = vmatpush1.bf16.msra.mxu0 0
      %1554 = vmatprep.subr.bf16.mxu0 0
      %1555 = vmatpush1.bf16.msra.mxu0 0
      %1556 = vmatprep.subr.bf16.mxu0 0
      %1557 = vmatpush1.bf16.msra.mxu0 0
      %1558 = vmatprep.subr.bf16.mxu0 0
      %1559 = vmatpush1.bf16.msra.mxu0 0
      %1560 = vmatprep.subr.bf16.mxu0 0
      %1561 = vmatpush1.bf16.msra.mxu0 0
      %1562 = vmatprep.subr.bf16.mxu0 0
      %1563 = vmatpush1.bf16.msra.mxu0 0
      %1564 = vmatprep.subr.bf16.mxu0 0
      %1565 = vmatpush1.bf16.msra.mxu0 0
      %1566 = vmatprep.subr.bf16.mxu0 0
      %1567 = vmatpush1.bf16.msra.mxu0 0
      %1568 = vmatprep.mubr.bf16.mxu0 0
      %1569 = vmatmul.mubr.bf16.gmra.mrb[0].mxu0 %v1525
      %v1570 = vpop.f32.mrb[0].mxu0
      %v1571 = vadd.f32 %v1478, %v1570
      %v1572 = vpop.f32.mrb[0].mxu0
      %v1573 = vadd.f32 %v1480, %v1572
      %v1574 = vpop.f32.mrb[0].mxu0
      %v1575 = vpop.f32.mrb[0].mxu0
      %1576 = vdwg.mxu0
      %1577 = vmatprep.subr.bf16.mxu0 0
      %1578 = vmatpush1.bf16.msra.mxu0 %v1534
      %1579 = vmatprep.subr.bf16.mxu0 0
      %1580 = vmatpush1.bf16.msra.mxu0 0
      %1581 = vmatprep.subr.bf16.mxu0 0
      %1582 = vmatpush1.bf16.msra.mxu0 0
      %1583 = vmatprep.subr.bf16.mxu0 0
      %1584 = vmatpush1.bf16.msra.mxu0 0
      %1585 = vmatprep.subr.bf16.mxu0 0
      %1586 = vmatpush1.bf16.msra.mxu0 0
      %1587 = vmatprep.subr.bf16.mxu0 0
      %1588 = vmatpush1.bf16.msra.mxu0 0
      %1589 = vmatprep.subr.bf16.mxu0 0
      %1590 = vmatpush1.bf16.msra.mxu0 0
      %1591 = vmatprep.subr.bf16.mxu0 0
      %1592 = vmatpush1.bf16.msra.mxu0 0
      %1593 = vmatprep.subr.bf16.mxu0 0
      %1594 = vmatpush1.bf16.msra.mxu0 0
      %1595 = vmatprep.subr.bf16.mxu0 0
      %1596 = vmatpush1.bf16.msra.mxu0 0
      %1597 = vmatprep.subr.bf16.mxu0 0
      %1598 = vmatpush1.bf16.msra.mxu0 0
      %1599 = vmatprep.subr.bf16.mxu0 0
      %1600 = vmatpush1.bf16.msra.mxu0 0
      %1601 = vmatprep.subr.bf16.mxu0 0
      %1602 = vmatpush1.bf16.msra.mxu0 0
      %1603 = vmatprep.subr.bf16.mxu0 0
      %1604 = vmatpush1.bf16.msra.mxu0 0
      %1605 = vmatprep.subr.bf16.mxu0 0
      %1606 = vmatpush1.bf16.msra.mxu0 0
      %1607 = vmatprep.subr.bf16.mxu0 0
      %1608 = vmatpush1.bf16.msra.mxu0 0
      %1609 = vmatprep.mubr.bf16.mxu0 0
      %1610 = vmatmul.mubr.bf16.gmra.mrb[0].mxu0 %v1525
      %v1611 = vpop.f32.mrb[0].mxu0
      %v1612 = vadd.f32 %v1519, %v1611
      %v1613 = vpop.f32.mrb[0].mxu0
      %v1614 = vpop.f32.mrb[0].mxu0
      %v1615 = vpop.f32.mrb[0].mxu0
      %1616 = vdwg.mxu0
      %s1617 = scalar_lea.vmem %s5, 8
      %v1618 = vld [vmem:[%s1617] sm:$0xf]
      %1619 = vrot.lane.b32.xlu0 %v1415, 126
      %v1620 = vpop.permute.xlu0 %1619
      %1621 = vrot.lane.b32.xlu0 %v1416, 126
      %v1622 = vpop.permute.xlu0 %1621
      %1623 = vrot.lane.b32.xlu0 %v1417, 126
      %v1624 = vpop.permute.xlu0 %1623
      %v1625 = vsel %vm498, %v1620, %v1622
      %v1626 = vsel %vm498, %v1622, %v1624
      %v1628 = vsel %vm302, %v1618, 0
      %v1631 = vsel %vm306, %v1625, 0
      %v1634 = vsel %vm306, %v1626, 0
      %v1637 = vsel %vm306, %v1624, 0
      %1639 = vmatprep.subr.bf16.mxu0 %v1634
      %1640 = vmatpush1.bf16.msra.mxu0 %v1631
      %1641 = vmatprep.subr.bf16.mxu0 0
      %1642 = vmatpush1.bf16.msra.mxu0 0
      %1643 = vmatprep.subr.bf16.mxu0 0
      %1644 = vmatpush1.bf16.msra.mxu0 0
      %1645 = vmatprep.subr.bf16.mxu0 0
      %1646 = vmatpush1.bf16.msra.mxu0 0
      %1647 = vmatprep.subr.bf16.mxu0 0
      %1648 = vmatpush1.bf16.msra.mxu0 0
      %1649 = vmatprep.subr.bf16.mxu0 0
      %1650 = vmatpush1.bf16.msra.mxu0 0
      %1651 = vmatprep.subr.bf16.mxu0 0
      %1652 = vmatpush1.bf16.msra.mxu0 0
      %1653 = vmatprep.subr.bf16.mxu0 0
      %1654 = vmatpush1.bf16.msra.mxu0 0
      %1655 = vmatprep.subr.bf16.mxu0 0
      %1656 = vmatpush1.bf16.msra.mxu0 0
      %1657 = vmatprep.subr.bf16.mxu0 0
      %1658 = vmatpush1.bf16.msra.mxu0 0
      %1659 = vmatprep.subr.bf16.mxu0 0
      %1660 = vmatpush1.bf16.msra.mxu0 0
      %1661 = vmatprep.subr.bf16.mxu0 0
      %1662 = vmatpush1.bf16.msra.mxu0 0
      %1663 = vmatprep.subr.bf16.mxu0 0
      %1664 = vmatpush1.bf16.msra.mxu0 0
      %1665 = vmatprep.subr.bf16.mxu0 0
      %1666 = vmatpush1.bf16.msra.mxu0 0
      %1667 = vmatprep.subr.bf16.mxu0 0
      %1668 = vmatpush1.bf16.msra.mxu0 0
      %1669 = vmatprep.subr.bf16.mxu0 0
      %1670 = vmatpush1.bf16.msra.mxu0 0
      %1671 = vmatprep.mubr.bf16.mxu0 0
      %1672 = vmatmul.mubr.bf16.gmra.mrb[0].mxu0 %v1628
      %v1673 = vpop.f32.mrb[0].mxu0
      %v1674 = vadd.f32 0.0, %v1673
      %v1675 = vpop.f32.mrb[0].mxu0
      %v1676 = vadd.f32 0.0, %v1675
      %v1677 = vpop.f32.mrb[0].mxu0
      %v1678 = vpop.f32.mrb[0].mxu0
      %1679 = vdwg.mxu0
      %1680 = vmatprep.subr.bf16.mxu0 0
      %1681 = vmatpush1.bf16.msra.mxu0 %v1637
      %1682 = vmatprep.subr.bf16.mxu0 0
      %1683 = vmatpush1.bf16.msra.mxu0 0
      %1684 = vmatprep.subr.bf16.mxu0 0
      %1685 = vmatpush1.bf16.msra.mxu0 0
      %1686 = vmatprep.subr.bf16.mxu0 0
      %1687 = vmatpush1.bf16.msra.mxu0 0
      %1688 = vmatprep.subr.bf16.mxu0 0
      %1689 = vmatpush1.bf16.msra.mxu0 0
      %1690 = vmatprep.subr.bf16.mxu0 0
      %1691 = vmatpush1.bf16.msra.mxu0 0
      %1692 = vmatprep.subr.bf16.mxu0 0
      %1693 = vmatpush1.bf16.msra.mxu0 0
      %1694 = vmatprep.subr.bf16.mxu0 0
      %1695 = vmatpush1.bf16.msra.mxu0 0
      %1696 = vmatprep.subr.bf16.mxu0 0
      %1697 = vmatpush1.bf16.msra.mxu0 0
      %1698 = vmatprep.subr.bf16.mxu0 0
      %1699 = vmatpush1.bf16.msra.mxu0 0
      %1700 = vmatprep.subr.bf16.mxu0 0
      %1701 = vmatpush1.bf16.msra.mxu0 0
      %1702 = vmatprep.subr.bf16.mxu0 0
      %1703 = vmatpush1.bf16.msra.mxu0 0
      %1704 = vmatprep.subr.bf16.mxu0 0
      %1705 = vmatpush1.bf16.msra.mxu0 0
      %1706 = vmatprep.subr.bf16.mxu0 0
      %1707 = vmatpush1.bf16.msra.mxu0 0
      %1708 = vmatprep.subr.bf16.mxu0 0
      %1709 = vmatpush1.bf16.msra.mxu0 0
      %1710 = vmatprep.subr.bf16.mxu0 0
      %1711 = vmatpush1.bf16.msra.mxu0 0
      %1712 = vmatprep.mubr.bf16.mxu0 0
      %1713 = vmatmul.mubr.bf16.gmra.mrb[0].mxu0 %v1628
      %v1714 = vpop.f32.mrb[0].mxu0
      %v1715 = vadd.f32 0.0, %v1714
      %v1716 = vpop.f32.mrb[0].mxu0
      %v1717 = vpop.f32.mrb[0].mxu0
      %v1718 = vpop.f32.mrb[0].mxu0
      %1719 = vdwg.mxu0
      %v1720 = vadd.f32 %v1571, %v1674
      %v1721 = vadd.f32 %v1573, %v1676
      %v1722 = vadd.f32 %v1612, %v1715
      %s1723 = scalar_lea.vmem %s5, 12
      %v1724 = vld [vmem:[%s1723] sm:$0xf]
      %1725 = vrot.lane.b32.xlu0 %v1415, 110
      %v1726 = vpop.permute.xlu0 %1725
      %1727 = vrot.lane.b32.xlu0 %v1416, 110
      %v1728 = vpop.permute.xlu0 %1727
      %1729 = vrot.lane.b32.xlu0 %v1417, 110
      %v1730 = vpop.permute.xlu0 %1729
      %v1731 = vsel %vm605, %v1726, %v1728
      %v1732 = vsel %vm605, %v1728, %v1730
      %v1734 = vsel %vm302, %v1724, 0
      %v1737 = vsel %vm306, %v1731, 0
      %v1740 = vsel %vm306, %v1732, 0
      %v1743 = vsel %vm306, %v1730, 0
      %1745 = vmatprep.subr.bf16.mxu0 %v1740
      %1746 = vmatpush1.bf16.msra.mxu0 %v1737
      %1747 = vmatprep.subr.bf16.mxu0 0
      %1748 = vmatpush1.bf16.msra.mxu0 0
      %1749 = vmatprep.subr.bf16.mxu0 0
      %1750 = vmatpush1.bf16.msra.mxu0 0
      %1751 = vmatprep.subr.bf16.mxu0 0
      %1752 = vmatpush1.bf16.msra.mxu0 0
      %1753 = vmatprep.subr.bf16.mxu0 0
      %1754 = vmatpush1.bf16.msra.mxu0 0
      %1755 = vmatprep.subr.bf16.mxu0 0
      %1756 = vmatpush1.bf16.msra.mxu0 0
      %1757 = vmatprep.subr.bf16.mxu0 0
      %1758 = vmatpush1.bf16.msra.mxu0 0
      %1759 = vmatprep.subr.bf16.mxu0 0
      %1760 = vmatpush1.bf16.msra.mxu0 0
      %1761 = vmatprep.subr.bf16.mxu0 0
      %1762 = vmatpush1.bf16.msra.mxu0 0
      %1763 = vmatprep.subr.bf16.mxu0 0
      %1764 = vmatpush1.bf16.msra.mxu0 0
      %1765 = vmatprep.subr.bf16.mxu0 0
      %1766 = vmatpush1.bf16.msra.mxu0 0
      %1767 = vmatprep.subr.bf16.mxu0 0
      %1768 = vmatpush1.bf16.msra.mxu0 0
      %1769 = vmatprep.subr.bf16.mxu0 0
      %1770 = vmatpush1.bf16.msra.mxu0 0
      %1771 = vmatprep.subr.bf16.mxu0 0
      %1772 = vmatpush1.bf16.msra.mxu0 0
      %1773 = vmatprep.subr.bf16.mxu0 0
      %1774 = vmatpush1.bf16.msra.mxu0 0
      %1775 = vmatprep.subr.bf16.mxu0 0
      %1776 = vmatpush1.bf16.msra.mxu0 0
      %1777 = vmatprep.mubr.bf16.mxu0 0
      %1778 = vmatmul.mubr.bf16.gmra.mrb[0].mxu0 %v1734
      %v1779 = vpop.f32.mrb[0].mxu0
      %v1780 = vadd.f32 0.0, %v1779
      %v1781 = vpop.f32.mrb[0].mxu0
      %v1782 = vadd.f32 0.0, %v1781
      %v1783 = vpop.f32.mrb[0].mxu0
      %v1784 = vpop.f32.mrb[0].mxu0
      %1785 = vdwg.mxu0
      %1786 = vmatprep.subr.bf16.mxu0 0
      %1787 = vmatpush1.bf16.msra.mxu0 %v1743
      %1788 = vmatprep.subr.bf16.mxu0 0
      %1789 = vmatpush1.bf16.msra.mxu0 0
      %1790 = vmatprep.subr.bf16.mxu0 0
      %1791 = vmatpush1.bf16.msra.mxu0 0
      %1792 = vmatprep.subr.bf16.mxu0 0
      %1793 = vmatpush1.bf16.msra.mxu0 0
      %1794 = vmatprep.subr.bf16.mxu0 0
      %1795 = vmatpush1.bf16.msra.mxu0 0
      %1796 = vmatprep.subr.bf16.mxu0 0
      %1797 = vmatpush1.bf16.msra.mxu0 0
      %1798 = vmatprep.subr.bf16.mxu0 0
      %1799 = vmatpush1.bf16.msra.mxu0 0
      %1800 = vmatprep.subr.bf16.mxu0 0
      %1801 = vmatpush1.bf16.msra.mxu0 0
      %1802 = vmatprep.subr.bf16.mxu0 0
      %1803 = vmatpush1.bf16.msra.mxu0 0
      %1804 = vmatprep.subr.bf16.mxu0 0
      %1805 = vmatpush1.bf16.msra.mxu0 0
      %1806 = vmatprep.subr.bf16.mxu0 0
      %1807 = vmatpush1.bf16.msra.mxu0 0
      %1808 = vmatprep.subr.bf16.mxu0 0
      %1809 = vmatpush1.bf16.msra.mxu0 0
      %1810 = vmatprep.subr.bf16.mxu0 0
      %1811 = vmatpush1.bf16.msra.mxu0 0
      %1812 = vmatprep.subr.bf16.mxu0 0
      %1813 = vmatpush1.bf16.msra.mxu0 0
      %1814 = vmatprep.subr.bf16.mxu0 0
      %1815 = vmatpush1.bf16.msra.mxu0 0
      %1816 = vmatprep.subr.bf16.mxu0 0
      %1817 = vmatpush1.bf16.msra.mxu0 0
      %1818 = vmatprep.mubr.bf16.mxu0 0
      %1819 = vmatmul.mubr.bf16.gmra.mrb[0].mxu0 %v1734
      %v1820 = vpop.f32.mrb[0].mxu0
      %v1821 = vadd.f32 0.0, %v1820
      %v1822 = vpop.f32.mrb[0].mxu0
      %v1823 = vpop.f32.mrb[0].mxu0
      %v1824 = vpop.f32.mrb[0].mxu0
      %1825 = vdwg.mxu0
      %v1826 = vadd.f32 %v1720, %v1780
      %v1827 = vadd.f32 %v1721, %v1782
      %v1828 = vadd.f32 %v1722, %v1821
      %s1829 = scalar_lea.vmem %s5, 16
      %v1830 = vld [vmem:[%s1829] sm:$0xf]
      %1831 = vrot.lane.b32.xlu0 %v1415, 109
      %v1832 = vpop.permute.xlu0 %1831
      %1833 = vrot.lane.b32.xlu0 %v1416, 109
      %v1834 = vpop.permute.xlu0 %1833
      %1835 = vrot.lane.b32.xlu0 %v1417, 109
      %v1836 = vpop.permute.xlu0 %1835
      %v1837 = vsel %vm712, %v1832, %v1834
      %v1838 = vsel %vm712, %v1834, %v1836
      %v1840 = vsel %vm302, %v1830, 0
      %v1843 = vsel %vm306, %v1837, 0
      %v1846 = vsel %vm306, %v1838, 0
      %v1849 = vsel %vm306, %v1836, 0
      %1851 = vmatprep.subr.bf16.mxu0 %v1846
      %1852 = vmatpush1.bf16.msra.mxu0 %v1843
      %1853 = vmatprep.subr.bf16.mxu0 0
      %1854 = vmatpush1.bf16.msra.mxu0 0
      %1855 = vmatprep.subr.bf16.mxu0 0
      %1856 = vmatpush1.bf16.msra.mxu0 0
      %1857 = vmatprep.subr.bf16.mxu0 0
      %1858 = vmatpush1.bf16.msra.mxu0 0
      %1859 = vmatprep.subr.bf16.mxu0 0
      %1860 = vmatpush1.bf16.msra.mxu0 0
      %1861 = vmatprep.subr.bf16.mxu0 0
      %1862 = vmatpush1.bf16.msra.mxu0 0
      %1863 = vmatprep.subr.bf16.mxu0 0
      %1864 = vmatpush1.bf16.msra.mxu0 0
      %1865 = vmatprep.subr.bf16.mxu0 0
      %1866 = vmatpush1.bf16.msra.mxu0 0
      %1867 = vmatprep.subr.bf16.mxu0 0
      %1868 = vmatpush1.bf16.msra.mxu0 0
      %1869 = vmatprep.subr.bf16.mxu0 0
      %1870 = vmatpush1.bf16.msra.mxu0 0
      %1871 = vmatprep.subr.bf16.mxu0 0
      %1872 = vmatpush1.bf16.msra.mxu0 0
      %1873 = vmatprep.subr.bf16.mxu0 0
      %1874 = vmatpush1.bf16.msra.mxu0 0
      %1875 = vmatprep.subr.bf16.mxu0 0
      %1876 = vmatpush1.bf16.msra.mxu0 0
      %1877 = vmatprep.subr.bf16.mxu0 0
      %1878 = vmatpush1.bf16.msra.mxu0 0
      %1879 = vmatprep.subr.bf16.mxu0 0
      %1880 = vmatpush1.bf16.msra.mxu0 0
      %1881 = vmatprep.subr.bf16.mxu0 0
      %1882 = vmatpush1.bf16.msra.mxu0 0
      %1883 = vmatprep.mubr.bf16.mxu0 0
      %1884 = vmatmul.mubr.bf16.gmra.mrb[0].mxu0 %v1840
      %v1885 = vpop.f32.mrb[0].mxu0
      %v1886 = vadd.f32 0.0, %v1885
      %v1887 = vpop.f32.mrb[0].mxu0
      %v1888 = vadd.f32 0.0, %v1887
      %v1889 = vpop.f32.mrb[0].mxu0
      %v1890 = vpop.f32.mrb[0].mxu0
      %1891 = vdwg.mxu0
      %1892 = vmatprep.subr.bf16.mxu0 0
      %1893 = vmatpush1.bf16.msra.mxu0 %v1849
      %1894 = vmatprep.subr.bf16.mxu0 0
      %1895 = vmatpush1.bf16.msra.mxu0 0
      %1896 = vmatprep.subr.bf16.mxu0 0
      %1897 = vmatpush1.bf16.msra.mxu0 0
      %1898 = vmatprep.subr.bf16.mxu0 0
      %1899 = vmatpush1.bf16.msra.mxu0 0
      %1900 = vmatprep.subr.bf16.mxu0 0
      %1901 = vmatpush1.bf16.msra.mxu0 0
      %1902 = vmatprep.subr.bf16.mxu0 0
      %1903 = vmatpush1.bf16.msra.mxu0 0
      %1904 = vmatprep.subr.bf16.mxu0 0
      %1905 = vmatpush1.bf16.msra.mxu0 0
      %1906 = vmatprep.subr.bf16.mxu0 0
      %1907 = vmatpush1.bf16.msra.mxu0 0
      %1908 = vmatprep.subr.bf16.mxu0 0
      %1909 = vmatpush1.bf16.msra.mxu0 0
      %1910 = vmatprep.subr.bf16.mxu0 0
      %1911 = vmatpush1.bf16.msra.mxu0 0
      %1912 = vmatprep.subr.bf16.mxu0 0
      %1913 = vmatpush1.bf16.msra.mxu0 0
      %1914 = vmatprep.subr.bf16.mxu0 0
      %1915 = vmatpush1.bf16.msra.mxu0 0
      %1916 = vmatprep.subr.bf16.mxu0 0
      %1917 = vmatpush1.bf16.msra.mxu0 0
      %1918 = vmatprep.subr.bf16.mxu0 0
      %1919 = vmatpush1.bf16.msra.mxu0 0
      %1920 = vmatprep.subr.bf16.mxu0 0
      %1921 = vmatpush1.bf16.msra.mxu0 0
      %1922 = vmatprep.subr.bf16.mxu0 0
      %1923 = vmatpush1.bf16.msra.mxu0 0
      %1924 = vmatprep.mubr.bf16.mxu0 0
      %1925 = vmatmul.mubr.bf16.gmra.mrb[0].mxu0 %v1840
      %v1926 = vpop.f32.mrb[0].mxu0
      %v1927 = vadd.f32 0.0, %v1926
      %v1928 = vpop.f32.mrb[0].mxu0
      %v1929 = vpop.f32.mrb[0].mxu0
      %v1930 = vpop.f32.mrb[0].mxu0
      %1931 = vdwg.mxu0
      %v1932 = vadd.f32 %v1826, %v1886
      %v1933 = vadd.f32 %v1827, %v1888
      %v1934 = vadd.f32 %v1828, %v1927
      %s1935 = scalar_lea.vmem %s5, 20
      %v1936 = vld [vmem:[%s1935] sm:$0xf]
      %1937 = vrot.lane.b32.xlu0 %v1415, 108
      %v1938 = vpop.permute.xlu0 %1937
      %1939 = vrot.lane.b32.xlu0 %v1416, 108
      %v1940 = vpop.permute.xlu0 %1939
      %1941 = vrot.lane.b32.xlu0 %v1417, 108
      %v1942 = vpop.permute.xlu0 %1941
      %v1943 = vsel %vm819, %v1938, %v1940
      %v1944 = vsel %vm819, %v1940, %v1942
      %v1946 = vsel %vm302, %v1936, 0
      %v1949 = vsel %vm306, %v1943, 0
      %v1952 = vsel %vm306, %v1944, 0
      %v1955 = vsel %vm306, %v1942, 0
      %1957 = vmatprep.subr.bf16.mxu0 %v1952
      %1958 = vmatpush1.bf16.msra.mxu0 %v1949
      %1959 = vmatprep.subr.bf16.mxu0 0
      %1960 = vmatpush1.bf16.msra.mxu0 0
      %1961 = vmatprep.subr.bf16.mxu0 0
      %1962 = vmatpush1.bf16.msra.mxu0 0
      %1963 = vmatprep.subr.bf16.mxu0 0
      %1964 = vmatpush1.bf16.msra.mxu0 0
      %1965 = vmatprep.subr.bf16.mxu0 0
      %1966 = vmatpush1.bf16.msra.mxu0 0
      %1967 = vmatprep.subr.bf16.mxu0 0
      %1968 = vmatpush1.bf16.msra.mxu0 0
      %1969 = vmatprep.subr.bf16.mxu0 0
      %1970 = vmatpush1.bf16.msra.mxu0 0
      %1971 = vmatprep.subr.bf16.mxu0 0
      %1972 = vmatpush1.bf16.msra.mxu0 0
      %1973 = vmatprep.subr.bf16.mxu0 0
      %1974 = vmatpush1.bf16.msra.mxu0 0
      %1975 = vmatprep.subr.bf16.mxu0 0
      %1976 = vmatpush1.bf16.msra.mxu0 0
      %1977 = vmatprep.subr.bf16.mxu0 0
      %1978 = vmatpush1.bf16.msra.mxu0 0
      %1979 = vmatprep.subr.bf16.mxu0 0
      %1980 = vmatpush1.bf16.msra.mxu0 0
      %1981 = vmatprep.subr.bf16.mxu0 0
      %1982 = vmatpush1.bf16.msra.mxu0 0
      %1983 = vmatprep.subr.bf16.mxu0 0
      %1984 = vmatpush1.bf16.msra.mxu0 0
      %1985 = vmatprep.subr.bf16.mxu0 0
      %1986 = vmatpush1.bf16.msra.mxu0 0
      %1987 = vmatprep.subr.bf16.mxu0 0
      %1988 = vmatpush1.bf16.msra.mxu0 0
      %1989 = vmatprep.mubr.bf16.mxu0 0
      %1990 = vmatmul.mubr.bf16.gmra.mrb[0].mxu0 %v1946
      %v1991 = vpop.f32.mrb[0].mxu0
      %v1992 = vadd.f32 0.0, %v1991
      %v1993 = vpop.f32.mrb[0].mxu0
      %v1994 = vadd.f32 0.0, %v1993
      %v1995 = vpop.f32.mrb[0].mxu0
      %v1996 = vpop.f32.mrb[0].mxu0
      %1997 = vdwg.mxu0
      %1998 = vmatprep.subr.bf16.mxu0 0
      %1999 = vmatpush1.bf16.msra.mxu0 %v1955
      %2000 = vmatprep.subr.bf16.mxu0 0
      %2001 = vmatpush1.bf16.msra.mxu0 0
      %2002 = vmatprep.subr.bf16.mxu0 0
      %2003 = vmatpush1.bf16.msra.mxu0 0
      %2004 = vmatprep.subr.bf16.mxu0 0
      %2005 = vmatpush1.bf16.msra.mxu0 0
      %2006 = vmatprep.subr.bf16.mxu0 0
      %2007 = vmatpush1.bf16.msra.mxu0 0
      %2008 = vmatprep.subr.bf16.mxu0 0
      %2009 = vmatpush1.bf16.msra.mxu0 0
      %2010 = vmatprep.subr.bf16.mxu0 0
      %2011 = vmatpush1.bf16.msra.mxu0 0
      %2012 = vmatprep.subr.bf16.mxu0 0
      %2013 = vmatpush1.bf16.msra.mxu0 0
      %2014 = vmatprep.subr.bf16.mxu0 0
      %2015 = vmatpush1.bf16.msra.mxu0 0
      %2016 = vmatprep.subr.bf16.mxu0 0
      %2017 = vmatpush1.bf16.msra.mxu0 0
      %2018 = vmatprep.subr.bf16.mxu0 0
      %2019 = vmatpush1.bf16.msra.mxu0 0
      %2020 = vmatprep.subr.bf16.mxu0 0
      %2021 = vmatpush1.bf16.msra.mxu0 0
      %2022 = vmatprep.subr.bf16.mxu0 0
      %2023 = vmatpush1.bf16.msra.mxu0 0
      %2024 = vmatprep.subr.bf16.mxu0 0
      %2025 = vmatpush1.bf16.msra.mxu0 0
      %2026 = vmatprep.subr.bf16.mxu0 0
      %2027 = vmatpush1.bf16.msra.mxu0 0
      %2028 = vmatprep.subr.bf16.mxu0 0
      %2029 = vmatpush1.bf16.msra.mxu0 0
      %2030 = vmatprep.mubr.bf16.mxu0 0
      %2031 = vmatmul.mubr.bf16.gmra.mrb[0].mxu0 %v1946
      %v2032 = vpop.f32.mrb[0].mxu0
      %v2033 = vadd.f32 0.0, %v2032
      %v2034 = vpop.f32.mrb[0].mxu0
      %v2035 = vpop.f32.mrb[0].mxu0
      %v2036 = vpop.f32.mrb[0].mxu0
      %2037 = vdwg.mxu0
      %v2038 = vadd.f32 %v1932, %v1992
      %v2039 = vadd.f32 %v1933, %v1994
      %v2040 = vadd.f32 %v1934, %v2033
      %s2041 = scalar_lea.vmem %s5, 24
      %v2042 = vld [vmem:[%s2041] sm:$0xf]
      %2043 = vrot.lane.b32.xlu0 %v1415, 92
      %v2044 = vpop.permute.xlu0 %2043
      %2045 = vrot.lane.b32.xlu0 %v1416, 92
      %v2046 = vpop.permute.xlu0 %2045
      %2047 = vrot.lane.b32.xlu0 %v1417, 92
      %v2048 = vpop.permute.xlu0 %2047
      %v2049 = vsel %vm926, %v2044, %v2046
      %v2050 = vsel %vm926, %v2046, %v2048
      %v2052 = vsel %vm302, %v2042, 0
      %v2055 = vsel %vm306, %v2049, 0
      %v2058 = vsel %vm306, %v2050, 0
      %v2061 = vsel %vm306, %v2048, 0
      %2063 = vmatprep.subr.bf16.mxu0 %v2058
      %2064 = vmatpush1.bf16.msra.mxu0 %v2055
      %2065 = vmatprep.subr.bf16.mxu0 0
      %2066 = vmatpush1.bf16.msra.mxu0 0
      %2067 = vmatprep.subr.bf16.mxu0 0
      %2068 = vmatpush1.bf16.msra.mxu0 0
      %2069 = vmatprep.subr.bf16.mxu0 0
      %2070 = vmatpush1.bf16.msra.mxu0 0
      %2071 = vmatprep.subr.bf16.mxu0 0
      %2072 = vmatpush1.bf16.msra.mxu0 0
      %2073 = vmatprep.subr.bf16.mxu0 0
      %2074 = vmatpush1.bf16.msra.mxu0 0
      %2075 = vmatprep.subr.bf16.mxu0 0
      %2076 = vmatpush1.bf16.msra.mxu0 0
      %2077 = vmatprep.subr.bf16.mxu0 0
      %2078 = vmatpush1.bf16.msra.mxu0 0
      %2079 = vmatprep.subr.bf16.mxu0 0
      %2080 = vmatpush1.bf16.msra.mxu0 0
      %2081 = vmatprep.subr.bf16.mxu0 0
      %2082 = vmatpush1.bf16.msra.mxu0 0
      %2083 = vmatprep.subr.bf16.mxu0 0
      %2084 = vmatpush1.bf16.msra.mxu0 0
      %2085 = vmatprep.subr.bf16.mxu0 0
      %2086 = vmatpush1.bf16.msra.mxu0 0
      %2087 = vmatprep.subr.bf16.mxu0 0
      %2088 = vmatpush1.bf16.msra.mxu0 0
      %2089 = vmatprep.subr.bf16.mxu0 0
      %2090 = vmatpush1.bf16.msra.mxu0 0
      %2091 = vmatprep.subr.bf16.mxu0 0
      %2092 = vmatpush1.bf16.msra.mxu0 0
      %2093 = vmatprep.subr.bf16.mxu0 0
      %2094 = vmatpush1.bf16.msra.mxu0 0
      %2095 = vmatprep.mubr.bf16.mxu0 0
      %2096 = vmatmul.mubr.bf16.gmra.mrb[0].mxu0 %v2052
      %v2097 = vpop.f32.mrb[0].mxu0
      %v2098 = vadd.f32 0.0, %v2097
      %v2099 = vpop.f32.mrb[0].mxu0
      %v2100 = vadd.f32 0.0, %v2099
      %v2101 = vpop.f32.mrb[0].mxu0
      %v2102 = vpop.f32.mrb[0].mxu0
      %2103 = vdwg.mxu0
      %2104 = vmatprep.subr.bf16.mxu0 0
      %2105 = vmatpush1.bf16.msra.mxu0 %v2061
      %2106 = vmatprep.subr.bf16.mxu0 0
      %2107 = vmatpush1.bf16.msra.mxu0 0
      %2108 = vmatprep.subr.bf16.mxu0 0
      %2109 = vmatpush1.bf16.msra.mxu0 0
      %2110 = vmatprep.subr.bf16.mxu0 0
      %2111 = vmatpush1.bf16.msra.mxu0 0
      %2112 = vmatprep.subr.bf16.mxu0 0
      %2113 = vmatpush1.bf16.msra.mxu0 0
      %2114 = vmatprep.subr.bf16.mxu0 0
      %2115 = vmatpush1.bf16.msra.mxu0 0
      %2116 = vmatprep.subr.bf16.mxu0 0
      %2117 = vmatpush1.bf16.msra.mxu0 0
      %2118 = vmatprep.subr.bf16.mxu0 0
      %2119 = vmatpush1.bf16.msra.mxu0 0
      %2120 = vmatprep.subr.bf16.mxu0 0
      %2121 = vmatpush1.bf16.msra.mxu0 0
      %2122 = vmatprep.subr.bf16.mxu0 0
      %2123 = vmatpush1.bf16.msra.mxu0 0
      %2124 = vmatprep.subr.bf16.mxu0 0
      %2125 = vmatpush1.bf16.msra.mxu0 0
      %2126 = vmatprep.subr.bf16.mxu0 0
      %2127 = vmatpush1.bf16.msra.mxu0 0
      %2128 = vmatprep.subr.bf16.mxu0 0
      %2129 = vmatpush1.bf16.msra.mxu0 0
      %2130 = vmatprep.subr.bf16.mxu0 0
      %2131 = vmatpush1.bf16.msra.mxu0 0
      %2132 = vmatprep.subr.bf16.mxu0 0
      %2133 = vmatpush1.bf16.msra.mxu0 0
      %2134 = vmatprep.subr.bf16.mxu0 0
      %2135 = vmatpush1.bf16.msra.mxu0 0
      %2136 = vmatprep.mubr.bf16.mxu0 0
      %2137 = vmatmul.mubr.bf16.gmra.mrb[0].mxu0 %v2052
      %v2138 = vpop.f32.mrb[0].mxu0
      %v2139 = vadd.f32 0.0, %v2138
      %v2140 = vpop.f32.mrb[0].mxu0
      %v2141 = vpop.f32.mrb[0].mxu0
      %v2142 = vpop.f32.mrb[0].mxu0
      %2143 = vdwg.mxu0
      %v2144 = vadd.f32 %v2038, %v2098
      %v2145 = vadd.f32 %v2039, %v2100
      %v2146 = vadd.f32 %v2040, %v2139
      %s2147 = scalar_lea.vmem %s5, 28
      %v2148 = vld [vmem:[%s2147] sm:$0xf]
      %2149 = vrot.lane.b32.xlu0 %v1415, 91
      %v2150 = vpop.permute.xlu0 %2149
      %2151 = vrot.lane.b32.xlu0 %v1416, 91
      %v2152 = vpop.permute.xlu0 %2151
      %2153 = vrot.lane.b32.xlu0 %v1417, 91
      %v2154 = vpop.permute.xlu0 %2153
      %v2155 = vsel %vm1033, %v2150, %v2152
      %v2156 = vsel %vm1033, %v2152, %v2154
      %v2158 = vsel %vm302, %v2148, 0
      %v2161 = vsel %vm306, %v2155, 0
      %v2164 = vsel %vm306, %v2156, 0
      %v2167 = vsel %vm306, %v2154, 0
      %2169 = vmatprep.subr.bf16.mxu0 %v2164
      %2170 = vmatpush1.bf16.msra.mxu0 %v2161
      %2171 = vmatprep.subr.bf16.mxu0 0
      %2172 = vmatpush1.bf16.msra.mxu0 0
      %2173 = vmatprep.subr.bf16.mxu0 0
      %2174 = vmatpush1.bf16.msra.mxu0 0
      %2175 = vmatprep.subr.bf16.mxu0 0
      %2176 = vmatpush1.bf16.msra.mxu0 0
      %2177 = vmatprep.subr.bf16.mxu0 0
      %2178 = vmatpush1.bf16.msra.mxu0 0
      %2179 = vmatprep.subr.bf16.mxu0 0
      %2180 = vmatpush1.bf16.msra.mxu0 0
      %2181 = vmatprep.subr.bf16.mxu0 0
      %2182 = vmatpush1.bf16.msra.mxu0 0
      %2183 = vmatprep.subr.bf16.mxu0 0
      %2184 = vmatpush1.bf16.msra.mxu0 0
      %2185 = vmatprep.subr.bf16.mxu0 0
      %2186 = vmatpush1.bf16.msra.mxu0 0
      %2187 = vmatprep.subr.bf16.mxu0 0
      %2188 = vmatpush1.bf16.msra.mxu0 0
      %2189 = vmatprep.subr.bf16.mxu0 0
      %2190 = vmatpush1.bf16.msra.mxu0 0
      %2191 = vmatprep.subr.bf16.mxu0 0
      %2192 = vmatpush1.bf16.msra.mxu0 0
      %2193 = vmatprep.subr.bf16.mxu0 0
      %2194 = vmatpush1.bf16.msra.mxu0 0
      %2195 = vmatprep.subr.bf16.mxu0 0
      %2196 = vmatpush1.bf16.msra.mxu0 0
      %2197 = vmatprep.subr.bf16.mxu0 0
      %2198 = vmatpush1.bf16.msra.mxu0 0
      %2199 = vmatprep.subr.bf16.mxu0 0
      %2200 = vmatpush1.bf16.msra.mxu0 0
      %2201 = vmatprep.mubr.bf16.mxu0 0
      %2202 = vmatmul.mubr.bf16.gmra.mrb[0].mxu0 %v2158
      %v2203 = vpop.f32.mrb[0].mxu0
      %v2204 = vadd.f32 0.0, %v2203
      %v2205 = vpop.f32.mrb[0].mxu0
      %v2206 = vadd.f32 0.0, %v2205
      %v2207 = vpop.f32.mrb[0].mxu0
      %v2208 = vpop.f32.mrb[0].mxu0
      %2209 = vdwg.mxu0
      %2210 = vmatprep.subr.bf16.mxu0 0
      %2211 = vmatpush1.bf16.msra.mxu0 %v2167
      %2212 = vmatprep.subr.bf16.mxu0 0
      %2213 = vmatpush1.bf16.msra.mxu0 0
      %2214 = vmatprep.subr.bf16.mxu0 0
      %2215 = vmatpush1.bf16.msra.mxu0 0
      %2216 = vmatprep.subr.bf16.mxu0 0
      %2217 = vmatpush1.bf16.msra.mxu0 0
      %2218 = vmatprep.subr.bf16.mxu0 0
      %2219 = vmatpush1.bf16.msra.mxu0 0
      %2220 = vmatprep.subr.bf16.mxu0 0
      %2221 = vmatpush1.bf16.msra.mxu0 0
      %2222 = vmatprep.subr.bf16.mxu0 0
      %2223 = vmatpush1.bf16.msra.mxu0 0
      %2224 = vmatprep.subr.bf16.mxu0 0
      %2225 = vmatpush1.bf16.msra.mxu0 0
      %2226 = vmatprep.subr.bf16.mxu0 0
      %2227 = vmatpush1.bf16.msra.mxu0 0
      %2228 = vmatprep.subr.bf16.mxu0 0
      %2229 = vmatpush1.bf16.msra.mxu0 0
      %2230 = vmatprep.subr.bf16.mxu0 0
      %2231 = vmatpush1.bf16.msra.mxu0 0
      %2232 = vmatprep.subr.bf16.mxu0 0
      %2233 = vmatpush1.bf16.msra.mxu0 0
      %2234 = vmatprep.subr.bf16.mxu0 0
      %2235 = vmatpush1.bf16.msra.mxu0 0
      %2236 = vmatprep.subr.bf16.mxu0 0
      %2237 = vmatpush1.bf16.msra.mxu0 0
      %2238 = vmatprep.subr.bf16.mxu0 0
      %2239 = vmatpush1.bf16.msra.mxu0 0
      %2240 = vmatprep.subr.bf16.mxu0 0
      %2241 = vmatpush1.bf16.msra.mxu0 0
      %2242 = vmatprep.mubr.bf16.mxu0 0
      %2243 = vmatmul.mubr.bf16.gmra.mrb[0].mxu0 %v2158
      %v2244 = vpop.f32.mrb[0].mxu0
      %v2245 = vadd.f32 0.0, %v2244
      %v2246 = vpop.f32.mrb[0].mxu0
      %v2247 = vpop.f32.mrb[0].mxu0
      %v2248 = vpop.f32.mrb[0].mxu0
      %2249 = vdwg.mxu0
      %v2250 = vadd.f32 %v2144, %v2204
      %v2251 = vadd.f32 %v2145, %v2206
      %v2252 = vadd.f32 %v2146, %v2245
      %s2253 = scalar_lea.vmem %s5, 32
      %v2254 = vld [vmem:[%s2253] sm:$0xf]
      %2255 = vrot.lane.b32.xlu0 %v1415, 90
      %v2256 = vpop.permute.xlu0 %2255
      %2257 = vrot.lane.b32.xlu0 %v1416, 90
      %v2258 = vpop.permute.xlu0 %2257
      %2259 = vrot.lane.b32.xlu0 %v1417, 90
      %v2260 = vpop.permute.xlu0 %2259
      %v2261 = vsel %vm1140, %v2256, %v2258
      %v2262 = vsel %vm1140, %v2258, %v2260
      %v2264 = vsel %vm302, %v2254, 0
      %v2267 = vsel %vm306, %v2261, 0
      %v2270 = vsel %vm306, %v2262, 0
      %v2273 = vsel %vm306, %v2260, 0
      %2275 = vmatprep.subr.bf16.mxu0 %v2270
      %2276 = vmatpush1.bf16.msra.mxu0 %v2267
      %2277 = vmatprep.subr.bf16.mxu0 0
      %2278 = vmatpush1.bf16.msra.mxu0 0
      %2279 = vmatprep.subr.bf16.mxu0 0
      %2280 = vmatpush1.bf16.msra.mxu0 0
      %2281 = vmatprep.subr.bf16.mxu0 0
      %2282 = vmatpush1.bf16.msra.mxu0 0
      %2283 = vmatprep.subr.bf16.mxu0 0
      %2284 = vmatpush1.bf16.msra.mxu0 0
      %2285 = vmatprep.subr.bf16.mxu0 0
      %2286 = vmatpush1.bf16.msra.mxu0 0
      %2287 = vmatprep.subr.bf16.mxu0 0
      %2288 = vmatpush1.bf16.msra.mxu0 0
      %2289 = vmatprep.subr.bf16.mxu0 0
      %2290 = vmatpush1.bf16.msra.mxu0 0
      %2291 = vmatprep.subr.bf16.mxu0 0
      %2292 = vmatpush1.bf16.msra.mxu0 0
      %2293 = vmatprep.subr.bf16.mxu0 0
      %2294 = vmatpush1.bf16.msra.mxu0 0
      %2295 = vmatprep.subr.bf16.mxu0 0
      %2296 = vmatpush1.bf16.msra.mxu0 0
      %2297 = vmatprep.subr.bf16.mxu0 0
      %2298 = vmatpush1.bf16.msra.mxu0 0
      %2299 = vmatprep.subr.bf16.mxu0 0
      %2300 = vmatpush1.bf16.msra.mxu0 0
      %2301 = vmatprep.subr.bf16.mxu0 0
      %2302 = vmatpush1.bf16.msra.mxu0 0
      %2303 = vmatprep.subr.bf16.mxu0 0
      %2304 = vmatpush1.bf16.msra.mxu0 0
      %2305 = vmatprep.subr.bf16.mxu0 0
      %2306 = vmatpush1.bf16.msra.mxu0 0
      %2307 = vmatprep.mubr.bf16.mxu0 0
      %2308 = vmatmul.mubr.bf16.gmra.mrb[0].mxu0 %v2264
      %v2309 = vpop.f32.mrb[0].mxu0
      %v2310 = vadd.f32 0.0, %v2309
      %v2311 = vpop.f32.mrb[0].mxu0
      %v2312 = vadd.f32 0.0, %v2311
      %v2313 = vpop.f32.mrb[0].mxu0
      %v2314 = vpop.f32.mrb[0].mxu0
      %2315 = vdwg.mxu0
      %2316 = vmatprep.subr.bf16.mxu0 0
      %2317 = vmatpush1.bf16.msra.mxu0 %v2273
      %2318 = vmatprep.subr.bf16.mxu0 0
      %2319 = vmatpush1.bf16.msra.mxu0 0
      %2320 = vmatprep.subr.bf16.mxu0 0
      %2321 = vmatpush1.bf16.msra.mxu0 0
      %2322 = vmatprep.subr.bf16.mxu0 0
      %2323 = vmatpush1.bf16.msra.mxu0 0
      %2324 = vmatprep.subr.bf16.mxu0 0
      %2325 = vmatpush1.bf16.msra.mxu0 0
      %2326 = vmatprep.subr.bf16.mxu0 0
      %2327 = vmatpush1.bf16.msra.mxu0 0
      %2328 = vmatprep.subr.bf16.mxu0 0
      %2329 = vmatpush1.bf16.msra.mxu0 0
      %2330 = vmatprep.subr.bf16.mxu0 0
      %2331 = vmatpush1.bf16.msra.mxu0 0
      %2332 = vmatprep.subr.bf16.mxu0 0
      %2333 = vmatpush1.bf16.msra.mxu0 0
      %2334 = vmatprep.subr.bf16.mxu0 0
      %2335 = vmatpush1.bf16.msra.mxu0 0
      %2336 = vmatprep.subr.bf16.mxu0 0
      %2337 = vmatpush1.bf16.msra.mxu0 0
      %2338 = vmatprep.subr.bf16.mxu0 0
      %2339 = vmatpush1.bf16.msra.mxu0 0
      %2340 = vmatprep.subr.bf16.mxu0 0
      %2341 = vmatpush1.bf16.msra.mxu0 0
      %2342 = vmatprep.subr.bf16.mxu0 0
      %2343 = vmatpush1.bf16.msra.mxu0 0
      %2344 = vmatprep.subr.bf16.mxu0 0
      %2345 = vmatpush1.bf16.msra.mxu0 0
      %2346 = vmatprep.subr.bf16.mxu0 0
      %2347 = vmatpush1.bf16.msra.mxu0 0
      %2348 = vmatprep.mubr.bf16.mxu0 0
      %2349 = vmatmul.mubr.bf16.gmra.mrb[0].mxu0 %v2264
      %v2350 = vpop.f32.mrb[0].mxu0
      %v2351 = vadd.f32 0.0, %v2350
      %v2352 = vpop.f32.mrb[0].mxu0
      %v2353 = vpop.f32.mrb[0].mxu0
      %v2354 = vpop.f32.mrb[0].mxu0
      %2355 = vdwg.mxu0
      %v2356 = vadd.f32 %v2250, %v2310
      %v2357 = vadd.f32 %v2251, %v2312
      %v2358 = vadd.f32 %v2252, %v2351
      %v2359 = vld [vmem:[%s6] sm:$0xff]
      %2361 = vset.pattern.permute.xlu0 0
      %2362 = vperm.xlu0 %2361, %v2359
      %v2363 = vpop.permute.xlu0 %2362
      %v2365 = vadd.f32 %v2356, %v2363
      %v2366 = vadd.f32 %v2357, %v2363
      %v2367 = vadd.f32 %v2358, %v2363
      %v2368 = vmax.f32 %v2365, 0.0
      %v2369 = vmax.f32 %v2366, 0.0
      %v2370 = vmax.f32 %v2367, 0.0
      %2371 = vst [vmem:[%s278] sm:$0xff] %v2368
      %2372 = vst [vmem:[%s278 + $0x8] sm:$0xff] %v2369
      %2373 = vst.msk [vmem:[%s278 + $0x10] sm:$0xff] %vm1263, %v2370
      %p2374 = scmp.lt.s32.totalorder %s18, 1
      %s2375 = scalar_select %p2374, %s18, 1
      %s2376 = smul.addr %s2375, 3
      %s2377 = smul.addr %s2376, 8
      %s2378 = scalar_lea.vmem %s7, %s2377
      // Predicated region
      $region49: #{basic_conv_block.1} parent=47 // pred_check
        %p2379 = pneg %p188
      $region50: #{basic_conv_block.1} parent=47 // pred_check_branch
        %2381 = sbr.rel (%p2379) target = $region52
      $region51: #{basic_conv_block.1} parent=47 // pred_region
        _
      $region52: #{basic_conv_block.1} parent=47 // pred_fallthru
        _
    $region48: #{basic_conv_block.1} parent=5 // pred_fallthru
      _
    %p2382 = scmp.le.s32.totalorder 2, %s13
    // Predicated region
    $region53: #{basic_conv_block.1} parent=5 // pred_check
      %p2383 = pneg %p2382
    $region54: #{basic_conv_block.1} parent=5 // pred_check_branch
      %2385 = sbr.rel (%p2383) target = $region56
    $region55: #{basic_conv_block.1} parent=5 // pred_region
      %s2386 = ssub.s32 %s13, 2
      // Predicated region
      $region57: #{basic_conv_block.1} parent=55 // pred_check
        %p2387 = pneg %p194
      $region58: #{basic_conv_block.1} parent=55 // pred_check_branch
        %2389 = sbr.rel (%p2387) target = $region60
      $region59: #{basic_conv_block.1} parent=55 // pred_region
        %p2390 = scmp.lt.s32.totalorder %s19, 1
        %s2391 = scalar_select %p2390, %s19, 1
        %s2392 = smul.addr %s2391, 3
        %s2393 = smul.addr %s2392, 8
        %s2394 = scalar_lea.vmem %s7, %s2393
      $region60: #{basic_conv_block.1} parent=55 // pred_fallthru
        _
    $region56: #{basic_conv_block.1} parent=5 // pred_fallthru
      _
  $region6: #{basic_conv_block.1} parent=0 // loop_footer
    %s17 = sadd.s32 1, %s13
  $region7: #{basic_conv_block.1} parent=0 // loop_footer_branch
    %12 = sbr.rel target = $region3
  $region8: #{basic_conv_block.1} parent=0 // loop_exit
    _

</llo_original>
